<compile_context>
chip_gen: v7x
topology: tpu7x:2x2x1
jax: 0.10.0
libtpu: 0.0.40
codegen_flags: <defaults>
</compile_context>

<pallas_src>
import functools

import numpy as np
import jax
import jax.numpy as jnp
from jax import lax
from jax.experimental import pallas as pl
from jax.experimental.pallas import tpu as pltpu


def _round_up(v, m):
    return (v + m - 1) // m * m


def _mixed_ron_kernel(xp_ref, h2h_ref, dg_ref, de_ref, out_ref,
                      hy_s, hz_s, u_s,
                      *, dt, threshold, reset, u_decay, dt_spiking, n_steps):
    """One grid step = `n_steps` recurrence steps over a (Bt, H) batch slice."""
    t_blk = pl.program_id(1)            # time-block index (serial axis)

    @pl.when(t_blk == 0)
    def _():
        hy_s[...] = jnp.zeros_like(hy_s)
        hz_s[...] = jnp.zeros_like(hz_s)
        u_s[...] = jnp.zeros_like(u_s)

    Bt, H = hy_s.shape
    h2h = h2h_ref[...]                                   # (H, H), VMEM-resident
    # Hoist (1, H) -> (Bt, H) broadcasts out of the unrolled loop (no CSE in-loop).
    dg = jnp.broadcast_to(dg_ref[...], (Bt, H))          # dt * gamma
    de = jnp.broadcast_to(de_ref[...], (Bt, H))          # dt * epsilon * harmonic

    hy = hy_s[...]
    hz = hz_s[...]
    u = u_s[...]

    # Fully-unrolled inner time loop (static indices -> dense loads/stores,
    # full LLO scheduler visibility).  n_steps is small (<= time_block).
    for i in range(n_steps):
        # --- spiking_osc: spike from the *old* u, reset where spiked, leaky decay.
        fired = u > threshold
        spike = fired.astype(jnp.float32)
        u = jnp.where(fired, jnp.float32(reset), u)
        u = u * u_decay                                  # u + R*C*dt*(-u)

        # --- oscillator update (x @ x2h + bias was hoisted into xp in the wrapper).
        pre = xp_ref[i] + jnp.dot(hy.astype(h2h.dtype), h2h,
                                  preferred_element_type=jnp.float32)
        hz = hz + dt * jnp.tanh(pre) - dg * hy - de * hz - dt_spiking * u
        hy = hy + dt * hz

        # --- packed, lane-dense writeback: [hy | hz | u | spike]
        out_ref[i, :, 0 * H:1 * H] = hy
        out_ref[i, :, 1 * H:2 * H] = hz
        out_ref[i, :, 2 * H:3 * H] = u
        out_ref[i, :, 3 * H:4 * H] = spike

    hy_s[...] = hy
    hz_s[...] = hz
    u_s[...] = u


def mixed_ron_forward(x, x2h, h2h, bias, gamma, epsilon, *,
                      dt, threshold, reset, resistance, capacity, p,
                      time_block=16, batch_block=None,
                      weight_dtype=jnp.float32):
    """x: (batch, time, n_inp).  Returns hy, hz, u, spk, each (batch, time, n_hid)."""
    B, T, n_inp = x.shape
    n_hid = h2h.shape[0]
    harmonic = float(n_hid * p)                # self.harmonic = n_hid * p
    spiking = float(n_hid) - harmonic          # self.spiking  = n_hid - harmonic
    f32 = jnp.float32

    # --- (8,128)-aligned padded sizes ---------------------------------------
    H = _round_up(n_hid, 128)                  # lane axis
    Bp = _round_up(B, 8)                       # sublane axis
    Tt = max(1, min(int(time_block), T))       # recurrence steps per grid block
    Tp = _round_up(T, Tt)
    Bt = Bp if batch_block is None else min(_round_up(int(batch_block), 8), Bp)
    Bp = _round_up(Bp, Bt)
    NB, NT = Bp // Bt, Tp // Tt

    # --- pad parameters (pad rows/cols are zero -> inert dynamics) ----------
    gamma_v = jnp.broadcast_to(jnp.asarray(gamma, f32).reshape(-1), (n_hid,))
    eps_v = jnp.broadcast_to(jnp.asarray(epsilon, f32).reshape(-1), (n_hid,))
    bias_v = jnp.broadcast_to(jnp.asarray(bias, f32).reshape(-1), (n_hid,))

    x_p = jnp.zeros((Bp, Tp, n_inp), f32).at[:B, :T, :].set(x.astype(f32))
    x2h_p = jnp.zeros((n_inp, H), f32).at[:, :n_hid].set(x2h.astype(f32))
    h2h_p = jnp.zeros((H, H), f32).at[:n_hid, :n_hid].set(h2h.astype(f32))
    bias_p = jnp.zeros((H,), f32).at[:n_hid].set(bias_v)
    gamma_p = jnp.zeros((H,), f32).at[:n_hid].set(gamma_v)
    eps_p = jnp.zeros((H,), f32).at[:n_hid].set(eps_v)

    # --- hoisted input projection: one large MXU matmul, written time-major.
    # TODO(synk): `self.bias` is referenced in cell() but never defined in the
    # original module; zeros are used and folded into the projection.
    x_proj = jnp.einsum('bti,ih->tbh', x_p, x2h_p,
                        precision=lax.Precision.HIGHEST,
                        preferred_element_type=f32) + bias_p[None, None, :]

    # --- folded constants (fewer VPU multiplies inside the serial loop) -----
    dt_gamma = (dt * gamma_p).reshape(1, H)
    dt_eps_h = (dt * harmonic * eps_p).reshape(1, H)
    u_decay = 1.0 - resistance * capacity * dt
    dt_spiking = dt * spiking

    kernel = functools.partial(
        _mixed_ron_kernel,
        dt=float(dt), threshold=float(threshold), reset=float(reset),
        u_decay=float(u_decay), dt_spiking=float(dt_spiking), n_steps=Tt)

    # TODO(synk): for very large n_hid on v7x (64 MiB VMEM) raise
    # vmem_limit_bytes and single-buffer the time-invariant h2h explicitly.
    packed = pl.pallas_call(
        kernel,
        out_shape=jax.ShapeDtypeStruct((Tp, Bp, 4 * H), f32),
        grid_spec=pltpu.PrefetchScalarGridSpec(
            num_scalar_prefetch=0,
            grid=(NB, NT),                                          # batch outer, time inner
            in_specs=[
                pl.BlockSpec((Tt, Bt, H), lambda b, t: (t, b, 0)),    # x_proj (+bias)
                pl.BlockSpec((H, H), lambda b, t: (0, 0)),            # h2h (VMEM-resident)
                pl.BlockSpec((1, H), lambda b, t: (0, 0)),            # dt*gamma
                pl.BlockSpec((1, H), lambda b, t: (0, 0)),            # dt*eps*harmonic
            ],
            out_specs=pl.BlockSpec((Tt, Bt, 4 * H), lambda b, t: (t, b, 0)),
            scratch_shapes=[
                pltpu.VMEM((Bt, H), f32),    # hy carry
                pltpu.VMEM((Bt, H), f32),    # hz carry
                pltpu.VMEM((Bt, H), f32),    # u  carry
            ],
        ),
        compiler_params=pltpu.CompilerParams(
            dimension_semantics=("parallel", "arbitrary")),           # batch ||, time serial
    )(x_proj, h2h_p.astype(weight_dtype), dt_gamma, dt_eps_h)

    # Back to (batch, time, n_hid); strip padding; unpack [hy | hz | u | spike].
    out = jnp.transpose(packed, (1, 0, 2))[:B, :T]
    hy = out[..., 0 * H:0 * H + n_hid]
    hz = out[..., 1 * H:1 * H + n_hid]
    u = out[..., 2 * H:2 * H + n_hid]
    spk = out[..., 3 * H:3 * H + n_hid]
    return hy, hz, u, spk


def mixed_ron_reference(x, x2h, h2h, bias, gamma, epsilon, *,
                        dt, threshold, reset, resistance, capacity, p):
    """Pure-JAX reference mirroring the PyTorch forward pass."""
    B, T, _ = x.shape
    n_hid = h2h.shape[0]
    harmonic = n_hid * p
    spiking = n_hid - harmonic
    hy = jnp.zeros((B, n_hid), jnp.float32)
    hz = jnp.zeros((B, n_hid), jnp.float32)
    u = jnp.zeros((B, n_hid), jnp.float32)
    hys, hzs, us, spks = [], [], [], []
    for t in range(T):
        xt = x[:, t]
        spike = (u > threshold).astype(jnp.float32)
        u = jnp.where(spike == 1.0, reset, u)
        u = u + resistance * capacity * dt * (-u)
        pre = (jnp.dot(xt, x2h, precision=lax.Precision.HIGHEST)
               + jnp.dot(hy, h2h, precision=lax.Precision.HIGHEST) + bias)
        hz = hz + dt * (jnp.tanh(pre) - gamma * hy
                        - (epsilon * (hz * harmonic) + u * spiking))
        hy = hy + dt * hz
        hys.append(hy); hzs.append(hz); us.append(u); spks.append(spike)
    return (jnp.stack(hys, 1), jnp.stack(hzs, 1),
            jnp.stack(us, 1), jnp.stack(spks, 1))


def init_params(key, n_inp, n_hid, *, rho, input_scaling,
                gamma_range, eps_range):
    """Deterministic synthetic parameters mirroring MixedRON.__init__ shapes."""
    k1, k2, k3, k4 = jax.random.split(key, 4)
    # h2h: 'full' topology (uniform [-1, 1]) rescaled to spectral radius rho.
    h2h = jax.random.uniform(k1, (n_hid, n_hid), minval=-1.0, maxval=1.0)
    h2h_np = np.asarray(h2h, dtype=np.float64)
    radius = float(np.max(np.abs(np.linalg.eigvals(h2h_np))))
    h2h = jnp.asarray(h2h_np * (rho / radius), dtype=jnp.float32)
    # x2h: uniform (0, 1) * input_scaling
    x2h = (jax.random.uniform(k2, (n_inp, n_hid)) * input_scaling).astype(jnp.float32)
    # gamma / epsilon per-unit vectors (tuple branch of __init__)
    gamma = (jax.random.uniform(k3, (n_hid,)) *
             (gamma_range[1] - gamma_range[0]) + gamma_range[0]).astype(jnp.float32)
    epsilon = (jax.random.uniform(k4, (n_hid,)) *
               (eps_range[1] - eps_range[0]) + eps_range[0]).astype(jnp.float32)
    # TODO(synk): `self.bias` is referenced in cell() but never defined in __init__; use zeros.
    bias = jnp.zeros((n_hid,), jnp.float32)
    return x2h, h2h, bias, gamma, epsilon


if __name__ == "__main__":
    B, T, n_inp, n_hid = 2, 8, 4, 32
    # Stable hyperparameters (|1 - dt*eps*harmonic| < 1) so the f32-vs-reference
    # comparison is not dominated by exponential error amplification.
    hp = dict(dt=0.05, threshold=1.0, reset=0.0,
              resistance=1.0, capacity=0.5, p=0.5)

    key = jax.random.PRNGKey(0)
    kx, kp = jax.random.split(key)
    x = jax.random.normal(kx, (B, T, n_inp), dtype=jnp.float32)
    x2h, h2h, bias, gamma, epsilon = init_params(
        kp, n_inp, n_hid, rho=0.9, input_scaling=1.0,
        gamma_range=(0.5, 1.5), eps_range=(0.4, 0.8))

    # f32 weights: tight check against the pure-JAX reference.
    hy, hz, u, spk = mixed_ron_forward(x, x2h, h2h, bias, gamma, epsilon,
                                       weight_dtype=jnp.float32, **hp)
    jax.block_until_ready((hy, hz, u, spk))

    hy_r, hz_r, u_r, spk_r = mixed_ron_reference(
        x, x2h, h2h, bias, gamma, epsilon, **hp)

    np.testing.assert_allclose(np.asarray(hy), np.asarray(hy_r), rtol=1e-3, atol=1e-4)
    np.testing.assert_allclose(np.asarray(hz), np.asarray(hz_r), rtol=1e-3, atol=1e-4)
    np.testing.assert_allclose(np.asarray(u), np.asarray(u_r), rtol=1e-3, atol=1e-4)
    np.testing.assert_allclose(np.asarray(spk), np.asarray(spk_r), rtol=1e-3, atol=1e-4)

    # bf16 weights (recommended on v6e/v7x): run + sanity check (looser numerics).
    outs_bf16 = mixed_ron_forward(x, x2h, h2h, bias, gamma, epsilon,
                                  weight_dtype=jnp.bfloat16, **hp)
    jax.block_until_ready(outs_bf16)
    assert all(bool(np.isfinite(np.asarray(o)).all()) for o in outs_bf16)

    print("KERNEL_OK")
</pallas_src>

<mosaic_0001>
module attributes {stable_mosaic.version = 11 : i64} {
  func.func @_mixed_ron_kernel(%arg0: i32, %arg1: i32, %arg2: memref<8x8x128xf32, #tpu.memory_space<vmem>>, %arg3: memref<128x128xf32, #tpu.memory_space<vmem>>, %arg4: memref<1x128xf32, #tpu.memory_space<vmem>>, %arg5: memref<1x128xf32, #tpu.memory_space<vmem>>, %arg6: memref<8x8x512xf32, #tpu.memory_space<vmem>>, %arg7: memref<8x128xf32, #tpu.memory_space<vmem>>, %arg8: memref<8x128xf32, #tpu.memory_space<vmem>>, %arg9: memref<8x128xf32, #tpu.memory_space<vmem>>) attributes {dimension_semantics = [#tpu.dimension_semantics<parallel>, #tpu.dimension_semantics<arbitrary>], iteration_bounds = array<i64: 1, 1>, scalar_prefetch = 0 : i64, scratch_operands = 3 : i64, tpu.core_type = #tpu.core_type<tc>, window_params = [{transform_indices = @transform_0, window_bounds = array<i64: 8, 8, 128>}, {pipeline_mode = #tpu.pipeline_mode<synchronous>, transform_indices = @transform_1, window_bounds = array<i64: 128, 128>}, {pipeline_mode = #tpu.pipeline_mode<synchronous>, transform_indices = @transform_2, window_bounds = array<i64: 1, 128>}, {pipeline_mode = #tpu.pipeline_mode<synchronous>, transform_indices = @transform_3, window_bounds = array<i64: 1, 128>}, {transform_indices = @transform_4, window_bounds = array<i64: 8, 8, 512>}]} {
    %c0_i32 = arith.constant 0 : i32
    %0 = arith.cmpi eq, %arg1, %c0_i32 : i32
    %1 = arith.extui %0 : i1 to i32
    %c0_i32_0 = arith.constant 0 : i32
    %2 = arith.cmpi ne, %1, %c0_i32_0 : i32
    scf.if %2 {
      %cst_183 = arith.constant 0.000000e+00 : f32
      %320 = vector.broadcast %cst_183 : f32 to vector<8x128xf32>
      %c0_184 = arith.constant 0 : index
      %c0_185 = arith.constant 0 : index
      %321 = vector.load %arg7[%c0_184, %c0_185] : memref<8x128xf32, #tpu.memory_space<vmem>>, vector<8x128xf32>
      tpu.vector_store %arg7[%c0_184, %c0_185], %320 {strides = array<i32>} : memref<8x128xf32, #tpu.memory_space<vmem>>, vector<8x128xf32>,
      %cst_186 = arith.constant 0.000000e+00 : f32
      %322 = vector.broadcast %cst_186 : f32 to vector<8x128xf32>
      %c0_187 = arith.constant 0 : index
      %c0_188 = arith.constant 0 : index
      %323 = vector.load %arg8[%c0_187, %c0_188] : memref<8x128xf32, #tpu.memory_space<vmem>>, vector<8x128xf32>
      tpu.vector_store %arg8[%c0_187, %c0_188], %322 {strides = array<i32>} : memref<8x128xf32, #tpu.memory_space<vmem>>, vector<8x128xf32>,
      %cst_189 = arith.constant 0.000000e+00 : f32
      %324 = vector.broadcast %cst_189 : f32 to vector<8x128xf32>
      %c0_190 = arith.constant 0 : index
      %c0_191 = arith.constant 0 : index
      %325 = vector.load %arg9[%c0_190, %c0_191] : memref<8x128xf32, #tpu.memory_space<vmem>>, vector<8x128xf32>
      tpu.vector_store %arg9[%c0_190, %c0_191], %324 {strides = array<i32>} : memref<8x128xf32, #tpu.memory_space<vmem>>, vector<8x128xf32>,
    } else {
    }
    %c0 = arith.constant 0 : index
    %c0_1 = arith.constant 0 : index
    %3 = vector.load %arg3[%c0, %c0_1] : memref<128x128xf32, #tpu.memory_space<vmem>>, vector<128x128xf32>
    %c0_2 = arith.constant 0 : index
    %c0_3 = arith.constant 0 : index
    %4 = vector.load %arg4[%c0_2, %c0_3] : memref<1x128xf32, #tpu.memory_space<vmem>>, vector<1x128xf32>
    %5 = vector.shape_cast %4 : vector<1x128xf32> to vector<1x128xf32>
    %6 = vector.broadcast %5 : vector<1x128xf32> to vector<8x128xf32>
    %c0_4 = arith.constant 0 : index
    %c0_5 = arith.constant 0 : index
    %7 = vector.load %arg5[%c0_4, %c0_5] : memref<1x128xf32, #tpu.memory_space<vmem>>, vector<1x128xf32>
    %8 = vector.shape_cast %7 : vector<1x128xf32> to vector<1x128xf32>
    %9 = vector.broadcast %8 : vector<1x128xf32> to vector<8x128xf32>
    %c0_6 = arith.constant 0 : index
    %c0_7 = arith.constant 0 : index
    %10 = vector.load %arg7[%c0_6, %c0_7] : memref<8x128xf32, #tpu.memory_space<vmem>>, vector<8x128xf32>
    %c0_8 = arith.constant 0 : index
    %c0_9 = arith.constant 0 : index
    %11 = vector.load %arg8[%c0_8, %c0_9] : memref<8x128xf32, #tpu.memory_space<vmem>>, vector<8x128xf32>
    %c0_10 = arith.constant 0 : index
    %c0_11 = arith.constant 0 : index
    %12 = vector.load %arg9[%c0_10, %c0_11] : memref<8x128xf32, #tpu.memory_space<vmem>>, vector<8x128xf32>
    %cst = arith.constant 1.000000e+00 : f32
    %13 = vector.broadcast %cst : f32 to vector<8x128xf32>
    %14 = arith.cmpf ogt, %12, %13 : vector<8x128xf32>
    %15 = arith.extui %14 : vector<8x128xi1> to vector<8x128xi32>
    %16 = arith.sitofp %15 : vector<8x128xi32> to vector<8x128xf32>
    %cst_12 = arith.constant 0.000000e+00 : f32
    %17 = vector.broadcast %cst_12 : f32 to vector<8x128xf32>
    %18 = arith.select %14, %17, %12 : vector<8x128xi1>, vector<8x128xf32>
    %cst_13 = arith.constant 9.750000e-01 : f32
    %19 = vector.broadcast %cst_13 : f32 to vector<8x128xf32>
    %20 = arith.mulf %18, %19 : vector<8x128xf32>
    %c0_14 = arith.constant 0 : index
    %c0_15 = arith.constant 0 : index
    %c0_16 = arith.constant 0 : index
    %21 = vector.load %arg2[%c0_14, %c0_15, %c0_16] : memref<8x8x128xf32, #tpu.memory_space<vmem>>, vector<1x8x128xf32>
    %22 = vector.shape_cast %21 : vector<1x8x128xf32> to vector<8x128xf32>
    %cst_17 = arith.constant dense<0.000000e+00> : vector<8x128xf32>
    %23 = tpu.matmul %10, %3, %cst_17 {dimension_numbers = #tpu.dot_dimension_numbers<[1], [0], [0], [1], [0, 0, 1, 1], [], []>} : vector<8x128xf32>, vector<128x128xf32>, vector<8x128xf32> -> vector<8x128xf32>
    %24 = arith.addf %22, %23 : vector<8x128xf32>
    %25 = math.tanh %24 : vector<8x128xf32>
    %cst_18 = arith.constant 5.000000e-02 : f32
    %26 = vector.broadcast %cst_18 : f32 to vector<8x128xf32>
    %27 = arith.mulf %26, %25 : vector<8x128xf32>
    %28 = arith.addf %11, %27 : vector<8x128xf32>
    %29 = arith.mulf %6, %10 : vector<8x128xf32>
    %30 = arith.subf %28, %29 : vector<8x128xf32>
    %31 = arith.mulf %9, %11 : vector<8x128xf32>
    %32 = arith.subf %30, %31 : vector<8x128xf32>
    %cst_19 = arith.constant 8.000000e-01 : f32
    %33 = vector.broadcast %cst_19 : f32 to vector<8x128xf32>
    %34 = arith.mulf %33, %20 : vector<8x128xf32>
    %35 = arith.subf %32, %34 : vector<8x128xf32>
    %cst_20 = arith.constant 5.000000e-02 : f32
    %36 = vector.broadcast %cst_20 : f32 to vector<8x128xf32>
    %37 = arith.mulf %36, %35 : vector<8x128xf32>
    %38 = arith.addf %10, %37 : vector<8x128xf32>
    %c0_21 = arith.constant 0 : index
    %c0_22 = arith.constant 0 : index
    %c0_23 = arith.constant 0 : index
    %39 = vector.load %arg6[%c0_21, %c0_22, %c0_23] : memref<8x8x512xf32, #tpu.memory_space<vmem>>, vector<1x8x128xf32>
    %40 = vector.shape_cast %39 : vector<1x8x128xf32> to vector<8x128xf32>
    %41 = vector.shape_cast %38 : vector<8x128xf32> to vector<1x8x128xf32>
    tpu.vector_store %arg6[%c0_21, %c0_22, %c0_23], %41 {strides = array<i32>} : memref<8x8x512xf32, #tpu.memory_space<vmem>>, vector<1x8x128xf32>,
    %c0_24 = arith.constant 0 : index
    %c0_25 = arith.constant 0 : index
    %c128 = arith.constant 128 : index
    %42 = vector.load %arg6[%c0_24, %c0_25, %c128] : memref<8x8x512xf32, #tpu.memory_space<vmem>>, vector<1x8x128xf32>
    %43 = vector.shape_cast %42 : vector<1x8x128xf32> to vector<8x128xf32>
    %44 = vector.shape_cast %35 : vector<8x128xf32> to vector<1x8x128xf32>
    tpu.vector_store %arg6[%c0_24, %c0_25, %c128], %44 {strides = array<i32>} : memref<8x8x512xf32, #tpu.memory_space<vmem>>, vector<1x8x128xf32>,
    %c0_26 = arith.constant 0 : index
    %c0_27 = arith.constant 0 : index
    %c256 = arith.constant 256 : index
    %45 = vector.load %arg6[%c0_26, %c0_27, %c256] : memref<8x8x512xf32, #tpu.memory_space<vmem>>, vector<1x8x128xf32>
    %46 = vector.shape_cast %45 : vector<1x8x128xf32> to vector<8x128xf32>
    %47 = vector.shape_cast %20 : vector<8x128xf32> to vector<1x8x128xf32>
    tpu.vector_store %arg6[%c0_26, %c0_27, %c256], %47 {strides = array<i32>} : memref<8x8x512xf32, #tpu.memory_space<vmem>>, vector<1x8x128xf32>,
    %c0_28 = arith.constant 0 : index
    %c0_29 = arith.constant 0 : index
    %c384 = arith.constant 384 : index
    %48 = vector.load %arg6[%c0_28, %c0_29, %c384] : memref<8x8x512xf32, #tpu.memory_space<vmem>>, vector<1x8x128xf32>
    %49 = vector.shape_cast %48 : vector<1x8x128xf32> to vector<8x128xf32>
    %50 = vector.shape_cast %16 : vector<8x128xf32> to vector<1x8x128xf32>
    tpu.vector_store %arg6[%c0_28, %c0_29, %c384], %50 {strides = array<i32>} : memref<8x8x512xf32, #tpu.memory_space<vmem>>, vector<1x8x128xf32>,
    %cst_30 = arith.constant 1.000000e+00 : f32
    %51 = vector.broadcast %cst_30 : f32 to vector<8x128xf32>
    %52 = arith.cmpf ogt, %20, %51 : vector<8x128xf32>
    %53 = arith.extui %52 : vector<8x128xi1> to vector<8x128xi32>
    %54 = arith.sitofp %53 : vector<8x128xi32> to vector<8x128xf32>
    %cst_31 = arith.constant 0.000000e+00 : f32
    %55 = vector.broadcast %cst_31 : f32 to vector<8x128xf32>
    %56 = arith.select %52, %55, %20 : vector<8x128xi1>, vector<8x128xf32>
    %cst_32 = arith.constant 9.750000e-01 : f32
    %57 = vector.broadcast %cst_32 : f32 to vector<8x128xf32>
    %58 = arith.mulf %56, %57 : vector<8x128xf32>
    %c1 = arith.constant 1 : index
    %c0_33 = arith.constant 0 : index
    %c0_34 = arith.constant 0 : index
    %59 = vector.load %arg2[%c1, %c0_33, %c0_34] : memref<8x8x128xf32, #tpu.memory_space<vmem>>, vector<1x8x128xf32>
    %60 = vector.shape_cast %59 : vector<1x8x128xf32> to vector<8x128xf32>
    %cst_35 = arith.constant dense<0.000000e+00> : vector<8x128xf32>
    %61 = tpu.matmul %38, %3, %cst_35 {dimension_numbers = #tpu.dot_dimension_numbers<[1], [0], [0], [1], [0, 0, 1, 1], [], []>} : vector<8x128xf32>, vector<128x128xf32>, vector<8x128xf32> -> vector<8x128xf32>
    %62 = arith.addf %60, %61 : vector<8x128xf32>
    %63 = math.tanh %62 : vector<8x128xf32>
    %cst_36 = arith.constant 5.000000e-02 : f32
    %64 = vector.broadcast %cst_36 : f32 to vector<8x128xf32>
    %65 = arith.mulf %64, %63 : vector<8x128xf32>
    %66 = arith.addf %35, %65 : vector<8x128xf32>
    %67 = arith.mulf %6, %38 : vector<8x128xf32>
    %68 = arith.subf %66, %67 : vector<8x128xf32>
    %69 = arith.mulf %9, %35 : vector<8x128xf32>
    %70 = arith.subf %68, %69 : vector<8x128xf32>
    %cst_37 = arith.constant 8.000000e-01 : f32
    %71 = vector.broadcast %cst_37 : f32 to vector<8x128xf32>
    %72 = arith.mulf %71, %58 : vector<8x128xf32>
    %73 = arith.subf %70, %72 : vector<8x128xf32>
    %cst_38 = arith.constant 5.000000e-02 : f32
    %74 = vector.broadcast %cst_38 : f32 to vector<8x128xf32>
    %75 = arith.mulf %74, %73 : vector<8x128xf32>
    %76 = arith.addf %38, %75 : vector<8x128xf32>
    %c1_39 = arith.constant 1 : index
    %c0_40 = arith.constant 0 : index
    %c0_41 = arith.constant 0 : index
    %77 = vector.load %arg6[%c1_39, %c0_40, %c0_41] : memref<8x8x512xf32, #tpu.memory_space<vmem>>, vector<1x8x128xf32>
    %78 = vector.shape_cast %77 : vector<1x8x128xf32> to vector<8x128xf32>
    %79 = vector.shape_cast %76 : vector<8x128xf32> to vector<1x8x128xf32>
    tpu.vector_store %arg6[%c1_39, %c0_40, %c0_41], %79 {strides = array<i32>} : memref<8x8x512xf32, #tpu.memory_space<vmem>>, vector<1x8x128xf32>,
    %c1_42 = arith.constant 1 : index
    %c0_43 = arith.constant 0 : index
    %c128_44 = arith.constant 128 : index
    %80 = vector.load %arg6[%c1_42, %c0_43, %c128_44] : memref<8x8x512xf32, #tpu.memory_space<vmem>>, vector<1x8x128xf32>
    %81 = vector.shape_cast %80 : vector<1x8x128xf32> to vector<8x128xf32>
    %82 = vector.shape_cast %73 : vector<8x128xf32> to vector<1x8x128xf32>
    tpu.vector_store %arg6[%c1_42, %c0_43, %c128_44], %82 {strides = array<i32>} : memref<8x8x512xf32, #tpu.memory_space<vmem>>, vector<1x8x128xf32>,
    %c1_45 = arith.constant 1 : index
    %c0_46 = arith.constant 0 : index
    %c256_47 = arith.constant 256 : index
    %83 = vector.load %arg6[%c1_45, %c0_46, %c256_47] : memref<8x8x512xf32, #tpu.memory_space<vmem>>, vector<1x8x128xf32>
    %84 = vector.shape_cast %83 : vector<1x8x128xf32> to vector<8x128xf32>
    %85 = vector.shape_cast %58 : vector<8x128xf32> to vector<1x8x128xf32>
    tpu.vector_store %arg6[%c1_45, %c0_46, %c256_47], %85 {strides = array<i32>} : memref<8x8x512xf32, #tpu.memory_space<vmem>>, vector<1x8x128xf32>,
    %c1_48 = arith.constant 1 : index
    %c0_49 = arith.constant 0 : index
    %c384_50 = arith.constant 384 : index
    %86 = vector.load %arg6[%c1_48, %c0_49, %c384_50] : memref<8x8x512xf32, #tpu.memory_space<vmem>>, vector<1x8x128xf32>
    %87 = vector.shape_cast %86 : vector<1x8x128xf32> to vector<8x128xf32>
    %88 = vector.shape_cast %54 : vector<8x128xf32> to vector<1x8x128xf32>
    tpu.vector_store %arg6[%c1_48, %c0_49, %c384_50], %88 {strides = array<i32>} : memref<8x8x512xf32, #tpu.memory_space<vmem>>, vector<1x8x128xf32>,
    %cst_51 = arith.constant 1.000000e+00 : f32
    %89 = vector.broadcast %cst_51 : f32 to vector<8x128xf32>
    %90 = arith.cmpf ogt, %58, %89 : vector<8x128xf32>
    %91 = arith.extui %90 : vector<8x128xi1> to vector<8x128xi32>
    %92 = arith.sitofp %91 : vector<8x128xi32> to vector<8x128xf32>
    %cst_52 = arith.constant 0.000000e+00 : f32
    %93 = vector.broadcast %cst_52 : f32 to vector<8x128xf32>
    %94 = arith.select %90, %93, %58 : vector<8x128xi1>, vector<8x128xf32>
    %cst_53 = arith.constant 9.750000e-01 : f32
    %95 = vector.broadcast %cst_53 : f32 to vector<8x128xf32>
    %96 = arith.mulf %94, %95 : vector<8x128xf32>
    %c2 = arith.constant 2 : index
    %c0_54 = arith.constant 0 : index
    %c0_55 = arith.constant 0 : index
    %97 = vector.load %arg2[%c2, %c0_54, %c0_55] : memref<8x8x128xf32, #tpu.memory_space<vmem>>, vector<1x8x128xf32>
    %98 = vector.shape_cast %97 : vector<1x8x128xf32> to vector<8x128xf32>
    %cst_56 = arith.constant dense<0.000000e+00> : vector<8x128xf32>
    %99 = tpu.matmul %76, %3, %cst_56 {dimension_numbers = #tpu.dot_dimension_numbers<[1], [0], [0], [1], [0, 0, 1, 1], [], []>} : vector<8x128xf32>, vector<128x128xf32>, vector<8x128xf32> -> vector<8x128xf32>
    %100 = arith.addf %98, %99 : vector<8x128xf32>
    %101 = math.tanh %100 : vector<8x128xf32>
    %cst_57 = arith.constant 5.000000e-02 : f32
    %102 = vector.broadcast %cst_57 : f32 to vector<8x128xf32>
    %103 = arith.mulf %102, %101 : vector<8x128xf32>
    %104 = arith.addf %73, %103 : vector<8x128xf32>
    %105 = arith.mulf %6, %76 : vector<8x128xf32>
    %106 = arith.subf %104, %105 : vector<8x128xf32>
    %107 = arith.mulf %9, %73 : vector<8x128xf32>
    %108 = arith.subf %106, %107 : vector<8x128xf32>
    %cst_58 = arith.constant 8.000000e-01 : f32
    %109 = vector.broadcast %cst_58 : f32 to vector<8x128xf32>
    %110 = arith.mulf %109, %96 : vector<8x128xf32>
    %111 = arith.subf %108, %110 : vector<8x128xf32>
    %cst_59 = arith.constant 5.000000e-02 : f32
    %112 = vector.broadcast %cst_59 : f32 to vector<8x128xf32>
    %113 = arith.mulf %112, %111 : vector<8x128xf32>
    %114 = arith.addf %76, %113 : vector<8x128xf32>
    %c2_60 = arith.constant 2 : index
    %c0_61 = arith.constant 0 : index
    %c0_62 = arith.constant 0 : index
    %115 = vector.load %arg6[%c2_60, %c0_61, %c0_62] : memref<8x8x512xf32, #tpu.memory_space<vmem>>, vector<1x8x128xf32>
    %116 = vector.shape_cast %115 : vector<1x8x128xf32> to vector<8x128xf32>
    %117 = vector.shape_cast %114 : vector<8x128xf32> to vector<1x8x128xf32>
    tpu.vector_store %arg6[%c2_60, %c0_61, %c0_62], %117 {strides = array<i32>} : memref<8x8x512xf32, #tpu.memory_space<vmem>>, vector<1x8x128xf32>,
    %c2_63 = arith.constant 2 : index
    %c0_64 = arith.constant 0 : index
    %c128_65 = arith.constant 128 : index
    %118 = vector.load %arg6[%c2_63, %c0_64, %c128_65] : memref<8x8x512xf32, #tpu.memory_space<vmem>>, vector<1x8x128xf32>
    %119 = vector.shape_cast %118 : vector<1x8x128xf32> to vector<8x128xf32>
    %120 = vector.shape_cast %111 : vector<8x128xf32> to vector<1x8x128xf32>
    tpu.vector_store %arg6[%c2_63, %c0_64, %c128_65], %120 {strides = array<i32>} : memref<8x8x512xf32, #tpu.memory_space<vmem>>, vector<1x8x128xf32>,
    %c2_66 = arith.constant 2 : index
    %c0_67 = arith.constant 0 : index
    %c256_68 = arith.constant 256 : index
    %121 = vector.load %arg6[%c2_66, %c0_67, %c256_68] : memref<8x8x512xf32, #tpu.memory_space<vmem>>, vector<1x8x128xf32>
    %122 = vector.shape_cast %121 : vector<1x8x128xf32> to vector<8x128xf32>
    %123 = vector.shape_cast %96 : vector<8x128xf32> to vector<1x8x128xf32>
    tpu.vector_store %arg6[%c2_66, %c0_67, %c256_68], %123 {strides = array<i32>} : memref<8x8x512xf32, #tpu.memory_space<vmem>>, vector<1x8x128xf32>,
    %c2_69 = arith.constant 2 : index
    %c0_70 = arith.constant 0 : index
    %c384_71 = arith.constant 384 : index
    %124 = vector.load %arg6[%c2_69, %c0_70, %c384_71] : memref<8x8x512xf32, #tpu.memory_space<vmem>>, vector<1x8x128xf32>
    %125 = vector.shape_cast %124 : vector<1x8x128xf32> to vector<8x128xf32>
    %126 = vector.shape_cast %92 : vector<8x128xf32> to vector<1x8x128xf32>
    tpu.vector_store %arg6[%c2_69, %c0_70, %c384_71], %126 {strides = array<i32>} : memref<8x8x512xf32, #tpu.memory_space<vmem>>, vector<1x8x128xf32>,
    %cst_72 = arith.constant 1.000000e+00 : f32
    %127 = vector.broadcast %cst_72 : f32 to vector<8x128xf32>
    %128 = arith.cmpf ogt, %96, %127 : vector<8x128xf32>
    %129 = arith.extui %128 : vector<8x128xi1> to vector<8x128xi32>
    %130 = arith.sitofp %129 : vector<8x128xi32> to vector<8x128xf32>
    %cst_73 = arith.constant 0.000000e+00 : f32
    %131 = vector.broadcast %cst_73 : f32 to vector<8x128xf32>
    %132 = arith.select %128, %131, %96 : vector<8x128xi1>, vector<8x128xf32>
    %cst_74 = arith.constant 9.750000e-01 : f32
    %133 = vector.broadcast %cst_74 : f32 to vector<8x128xf32>
    %134 = arith.mulf %132, %133 : vector<8x128xf32>
    %c3 = arith.constant 3 : index
    %c0_75 = arith.constant 0 : index
    %c0_76 = arith.constant 0 : index
    %135 = vector.load %arg2[%c3, %c0_75, %c0_76] : memref<8x8x128xf32, #tpu.memory_space<vmem>>, vector<1x8x128xf32>
    %136 = vector.shape_cast %135 : vector<1x8x128xf32> to vector<8x128xf32>
    %cst_77 = arith.constant dense<0.000000e+00> : vector<8x128xf32>
    %137 = tpu.matmul %114, %3, %cst_77 {dimension_numbers = #tpu.dot_dimension_numbers<[1], [0], [0], [1], [0, 0, 1, 1], [], []>} : vector<8x128xf32>, vector<128x128xf32>, vector<8x128xf32> -> vector<8x128xf32>
    %138 = arith.addf %136, %137 : vector<8x128xf32>
    %139 = math.tanh %138 : vector<8x128xf32>
    %cst_78 = arith.constant 5.000000e-02 : f32
    %140 = vector.broadcast %cst_78 : f32 to vector<8x128xf32>
    %141 = arith.mulf %140, %139 : vector<8x128xf32>
    %142 = arith.addf %111, %141 : vector<8x128xf32>
    %143 = arith.mulf %6, %114 : vector<8x128xf32>
    %144 = arith.subf %142, %143 : vector<8x128xf32>
    %145 = arith.mulf %9, %111 : vector<8x128xf32>
    %146 = arith.subf %144, %145 : vector<8x128xf32>
    %cst_79 = arith.constant 8.000000e-01 : f32
    %147 = vector.broadcast %cst_79 : f32 to vector<8x128xf32>
    %148 = arith.mulf %147, %134 : vector<8x128xf32>
    %149 = arith.subf %146, %148 : vector<8x128xf32>
    %cst_80 = arith.constant 5.000000e-02 : f32
    %150 = vector.broadcast %cst_80 : f32 to vector<8x128xf32>
    %151 = arith.mulf %150, %149 : vector<8x128xf32>
    %152 = arith.addf %114, %151 : vector<8x128xf32>
    %c3_81 = arith.constant 3 : index
    %c0_82 = arith.constant 0 : index
    %c0_83 = arith.constant 0 : index
    %153 = vector.load %arg6[%c3_81, %c0_82, %c0_83] : memref<8x8x512xf32, #tpu.memory_space<vmem>>, vector<1x8x128xf32>
    %154 = vector.shape_cast %153 : vector<1x8x128xf32> to vector<8x128xf32>
    %155 = vector.shape_cast %152 : vector<8x128xf32> to vector<1x8x128xf32>
    tpu.vector_store %arg6[%c3_81, %c0_82, %c0_83], %155 {strides = array<i32>} : memref<8x8x512xf32, #tpu.memory_space<vmem>>, vector<1x8x128xf32>,
    %c3_84 = arith.constant 3 : index
    %c0_85 = arith.constant 0 : index
    %c128_86 = arith.constant 128 : index
    %156 = vector.load %arg6[%c3_84, %c0_85, %c128_86] : memref<8x8x512xf32, #tpu.memory_space<vmem>>, vector<1x8x128xf32>
    %157 = vector.shape_cast %156 : vector<1x8x128xf32> to vector<8x128xf32>
    %158 = vector.shape_cast %149 : vector<8x128xf32> to vector<1x8x128xf32>
    tpu.vector_store %arg6[%c3_84, %c0_85, %c128_86], %158 {strides = array<i32>} : memref<8x8x512xf32, #tpu.memory_space<vmem>>, vector<1x8x128xf32>,
    %c3_87 = arith.constant 3 : index
    %c0_88 = arith.constant 0 : index
    %c256_89 = arith.constant 256 : index
    %159 = vector.load %arg6[%c3_87, %c0_88, %c256_89] : memref<8x8x512xf32, #tpu.memory_space<vmem>>, vector<1x8x128xf32>
    %160 = vector.shape_cast %159 : vector<1x8x128xf32> to vector<8x128xf32>
    %161 = vector.shape_cast %134 : vector<8x128xf32> to vector<1x8x128xf32>
    tpu.vector_store %arg6[%c3_87, %c0_88, %c256_89], %161 {strides = array<i32>} : memref<8x8x512xf32, #tpu.memory_space<vmem>>, vector<1x8x128xf32>,
    %c3_90 = arith.constant 3 : index
    %c0_91 = arith.constant 0 : index
    %c384_92 = arith.constant 384 : index
    %162 = vector.load %arg6[%c3_90, %c0_91, %c384_92] : memref<8x8x512xf32, #tpu.memory_space<vmem>>, vector<1x8x128xf32>
    %163 = vector.shape_cast %162 : vector<1x8x128xf32> to vector<8x128xf32>
    %164 = vector.shape_cast %130 : vector<8x128xf32> to vector<1x8x128xf32>
    tpu.vector_store %arg6[%c3_90, %c0_91, %c384_92], %164 {strides = array<i32>} : memref<8x8x512xf32, #tpu.memory_space<vmem>>, vector<1x8x128xf32>,
    %cst_93 = arith.constant 1.000000e+00 : f32
    %165 = vector.broadcast %cst_93 : f32 to vector<8x128xf32>
    %166 = arith.cmpf ogt, %134, %165 : vector<8x128xf32>
    %167 = arith.extui %166 : vector<8x128xi1> to vector<8x128xi32>
    %168 = arith.sitofp %167 : vector<8x128xi32> to vector<8x128xf32>
    %cst_94 = arith.constant 0.000000e+00 : f32
    %169 = vector.broadcast %cst_94 : f32 to vector<8x128xf32>
    %170 = arith.select %166, %169, %134 : vector<8x128xi1>, vector<8x128xf32>
    %cst_95 = arith.constant 9.750000e-01 : f32
    %171 = vector.broadcast %cst_95 : f32 to vector<8x128xf32>
    %172 = arith.mulf %170, %171 : vector<8x128xf32>
    %c4 = arith.constant 4 : index
    %c0_96 = arith.constant 0 : index
    %c0_97 = arith.constant 0 : index
    %173 = vector.load %arg2[%c4, %c0_96, %c0_97] : memref<8x8x128xf32, #tpu.memory_space<vmem>>, vector<1x8x128xf32>
    %174 = vector.shape_cast %173 : vector<1x8x128xf32> to vector<8x128xf32>
    %cst_98 = arith.constant dense<0.000000e+00> : vector<8x128xf32>
    %175 = tpu.matmul %152, %3, %cst_98 {dimension_numbers = #tpu.dot_dimension_numbers<[1], [0], [0], [1], [0, 0, 1, 1], [], []>} : vector<8x128xf32>, vector<128x128xf32>, vector<8x128xf32> -> vector<8x128xf32>
    %176 = arith.addf %174, %175 : vector<8x128xf32>
    %177 = math.tanh %176 : vector<8x128xf32>
    %cst_99 = arith.constant 5.000000e-02 : f32
    %178 = vector.broadcast %cst_99 : f32 to vector<8x128xf32>
    %179 = arith.mulf %178, %177 : vector<8x128xf32>
    %180 = arith.addf %149, %179 : vector<8x128xf32>
    %181 = arith.mulf %6, %152 : vector<8x128xf32>
    %182 = arith.subf %180, %181 : vector<8x128xf32>
    %183 = arith.mulf %9, %149 : vector<8x128xf32>
    %184 = arith.subf %182, %183 : vector<8x128xf32>
    %cst_100 = arith.constant 8.000000e-01 : f32
    %185 = vector.broadcast %cst_100 : f32 to vector<8x128xf32>
    %186 = arith.mulf %185, %172 : vector<8x128xf32>
    %187 = arith.subf %184, %186 : vector<8x128xf32>
    %cst_101 = arith.constant 5.000000e-02 : f32
    %188 = vector.broadcast %cst_101 : f32 to vector<8x128xf32>
    %189 = arith.mulf %188, %187 : vector<8x128xf32>
    %190 = arith.addf %152, %189 : vector<8x128xf32>
    %c4_102 = arith.constant 4 : index
    %c0_103 = arith.constant 0 : index
    %c0_104 = arith.constant 0 : index
    %191 = vector.load %arg6[%c4_102, %c0_103, %c0_104] : memref<8x8x512xf32, #tpu.memory_space<vmem>>, vector<1x8x128xf32>
    %192 = vector.shape_cast %191 : vector<1x8x128xf32> to vector<8x128xf32>
    %193 = vector.shape_cast %190 : vector<8x128xf32> to vector<1x8x128xf32>
    tpu.vector_store %arg6[%c4_102, %c0_103, %c0_104], %193 {strides = array<i32>} : memref<8x8x512xf32, #tpu.memory_space<vmem>>, vector<1x8x128xf32>,
    %c4_105 = arith.constant 4 : index
    %c0_106 = arith.constant 0 : index
    %c128_107 = arith.constant 128 : index
    %194 = vector.load %arg6[%c4_105, %c0_106, %c128_107] : memref<8x8x512xf32, #tpu.memory_space<vmem>>, vector<1x8x128xf32>
    %195 = vector.shape_cast %194 : vector<1x8x128xf32> to vector<8x128xf32>
    %196 = vector.shape_cast %187 : vector<8x128xf32> to vector<1x8x128xf32>
    tpu.vector_store %arg6[%c4_105, %c0_106, %c128_107], %196 {strides = array<i32>} : memref<8x8x512xf32, #tpu.memory_space<vmem>>, vector<1x8x128xf32>,
    %c4_108 = arith.constant 4 : index
    %c0_109 = arith.constant 0 : index
    %c256_110 = arith.constant 256 : index
    %197 = vector.load %arg6[%c4_108, %c0_109, %c256_110] : memref<8x8x512xf32, #tpu.memory_space<vmem>>, vector<1x8x128xf32>
    %198 = vector.shape_cast %197 : vector<1x8x128xf32> to vector<8x128xf32>
    %199 = vector.shape_cast %172 : vector<8x128xf32> to vector<1x8x128xf32>
    tpu.vector_store %arg6[%c4_108, %c0_109, %c256_110], %199 {strides = array<i32>} : memref<8x8x512xf32, #tpu.memory_space<vmem>>, vector<1x8x128xf32>,
    %c4_111 = arith.constant 4 : index
    %c0_112 = arith.constant 0 : index
    %c384_113 = arith.constant 384 : index
    %200 = vector.load %arg6[%c4_111, %c0_112, %c384_113] : memref<8x8x512xf32, #tpu.memory_space<vmem>>, vector<1x8x128xf32>
    %201 = vector.shape_cast %200 : vector<1x8x128xf32> to vector<8x128xf32>
    %202 = vector.shape_cast %168 : vector<8x128xf32> to vector<1x8x128xf32>
    tpu.vector_store %arg6[%c4_111, %c0_112, %c384_113], %202 {strides = array<i32>} : memref<8x8x512xf32, #tpu.memory_space<vmem>>, vector<1x8x128xf32>,
    %cst_114 = arith.constant 1.000000e+00 : f32
    %203 = vector.broadcast %cst_114 : f32 to vector<8x128xf32>
    %204 = arith.cmpf ogt, %172, %203 : vector<8x128xf32>
    %205 = arith.extui %204 : vector<8x128xi1> to vector<8x128xi32>
    %206 = arith.sitofp %205 : vector<8x128xi32> to vector<8x128xf32>
    %cst_115 = arith.constant 0.000000e+00 : f32
    %207 = vector.broadcast %cst_115 : f32 to vector<8x128xf32>
    %208 = arith.select %204, %207, %172 : vector<8x128xi1>, vector<8x128xf32>
    %cst_116 = arith.constant 9.750000e-01 : f32
    %209 = vector.broadcast %cst_116 : f32 to vector<8x128xf32>
    %210 = arith.mulf %208, %209 : vector<8x128xf32>
    %c5 = arith.constant 5 : index
    %c0_117 = arith.constant 0 : index
    %c0_118 = arith.constant 0 : index
    %211 = vector.load %arg2[%c5, %c0_117, %c0_118] : memref<8x8x128xf32, #tpu.memory_space<vmem>>, vector<1x8x128xf32>
    %212 = vector.shape_cast %211 : vector<1x8x128xf32> to vector<8x128xf32>
    %cst_119 = arith.constant dense<0.000000e+00> : vector<8x128xf32>
    %213 = tpu.matmul %190, %3, %cst_119 {dimension_numbers = #tpu.dot_dimension_numbers<[1], [0], [0], [1], [0, 0, 1, 1], [], []>} : vector<8x128xf32>, vector<128x128xf32>, vector<8x128xf32> -> vector<8x128xf32>
    %214 = arith.addf %212, %213 : vector<8x128xf32>
    %215 = math.tanh %214 : vector<8x128xf32>
    %cst_120 = arith.constant 5.000000e-02 : f32
    %216 = vector.broadcast %cst_120 : f32 to vector<8x128xf32>
    %217 = arith.mulf %216, %215 : vector<8x128xf32>
    %218 = arith.addf %187, %217 : vector<8x128xf32>
    %219 = arith.mulf %6, %190 : vector<8x128xf32>
    %220 = arith.subf %218, %219 : vector<8x128xf32>
    %221 = arith.mulf %9, %187 : vector<8x128xf32>
    %222 = arith.subf %220, %221 : vector<8x128xf32>
    %cst_121 = arith.constant 8.000000e-01 : f32
    %223 = vector.broadcast %cst_121 : f32 to vector<8x128xf32>
    %224 = arith.mulf %223, %210 : vector<8x128xf32>
    %225 = arith.subf %222, %224 : vector<8x128xf32>
    %cst_122 = arith.constant 5.000000e-02 : f32
    %226 = vector.broadcast %cst_122 : f32 to vector<8x128xf32>
    %227 = arith.mulf %226, %225 : vector<8x128xf32>
    %228 = arith.addf %190, %227 : vector<8x128xf32>
    %c5_123 = arith.constant 5 : index
    %c0_124 = arith.constant 0 : index
    %c0_125 = arith.constant 0 : index
    %229 = vector.load %arg6[%c5_123, %c0_124, %c0_125] : memref<8x8x512xf32, #tpu.memory_space<vmem>>, vector<1x8x128xf32>
    %230 = vector.shape_cast %229 : vector<1x8x128xf32> to vector<8x128xf32>
    %231 = vector.shape_cast %228 : vector<8x128xf32> to vector<1x8x128xf32>
    tpu.vector_store %arg6[%c5_123, %c0_124, %c0_125], %231 {strides = array<i32>} : memref<8x8x512xf32, #tpu.memory_space<vmem>>, vector<1x8x128xf32>,
    %c5_126 = arith.constant 5 : index
    %c0_127 = arith.constant 0 : index
    %c128_128 = arith.constant 128 : index
    %232 = vector.load %arg6[%c5_126, %c0_127, %c128_128] : memref<8x8x512xf32, #tpu.memory_space<vmem>>, vector<1x8x128xf32>
    %233 = vector.shape_cast %232 : vector<1x8x128xf32> to vector<8x128xf32>
    %234 = vector.shape_cast %225 : vector<8x128xf32> to vector<1x8x128xf32>
    tpu.vector_store %arg6[%c5_126, %c0_127, %c128_128], %234 {strides = array<i32>} : memref<8x8x512xf32, #tpu.memory_space<vmem>>, vector<1x8x128xf32>,
    %c5_129 = arith.constant 5 : index
    %c0_130 = arith.constant 0 : index
    %c256_131 = arith.constant 256 : index
    %235 = vector.load %arg6[%c5_129, %c0_130, %c256_131] : memref<8x8x512xf32, #tpu.memory_space<vmem>>, vector<1x8x128xf32>
    %236 = vector.shape_cast %235 : vector<1x8x128xf32> to vector<8x128xf32>
    %237 = vector.shape_cast %210 : vector<8x128xf32> to vector<1x8x128xf32>
    tpu.vector_store %arg6[%c5_129, %c0_130, %c256_131], %237 {strides = array<i32>} : memref<8x8x512xf32, #tpu.memory_space<vmem>>, vector<1x8x128xf32>,
    %c5_132 = arith.constant 5 : index
    %c0_133 = arith.constant 0 : index
    %c384_134 = arith.constant 384 : index
    %238 = vector.load %arg6[%c5_132, %c0_133, %c384_134] : memref<8x8x512xf32, #tpu.memory_space<vmem>>, vector<1x8x128xf32>
    %239 = vector.shape_cast %238 : vector<1x8x128xf32> to vector<8x128xf32>
    %240 = vector.shape_cast %206 : vector<8x128xf32> to vector<1x8x128xf32>
    tpu.vector_store %arg6[%c5_132, %c0_133, %c384_134], %240 {strides = array<i32>} : memref<8x8x512xf32, #tpu.memory_space<vmem>>, vector<1x8x128xf32>,
    %cst_135 = arith.constant 1.000000e+00 : f32
    %241 = vector.broadcast %cst_135 : f32 to vector<8x128xf32>
    %242 = arith.cmpf ogt, %210, %241 : vector<8x128xf32>
    %243 = arith.extui %242 : vector<8x128xi1> to vector<8x128xi32>
    %244 = arith.sitofp %243 : vector<8x128xi32> to vector<8x128xf32>
    %cst_136 = arith.constant 0.000000e+00 : f32
    %245 = vector.broadcast %cst_136 : f32 to vector<8x128xf32>
    %246 = arith.select %242, %245, %210 : vector<8x128xi1>, vector<8x128xf32>
    %cst_137 = arith.constant 9.750000e-01 : f32
    %247 = vector.broadcast %cst_137 : f32 to vector<8x128xf32>
    %248 = arith.mulf %246, %247 : vector<8x128xf32>
    %c6 = arith.constant 6 : index
    %c0_138 = arith.constant 0 : index
    %c0_139 = arith.constant 0 : index
    %249 = vector.load %arg2[%c6, %c0_138, %c0_139] : memref<8x8x128xf32, #tpu.memory_space<vmem>>, vector<1x8x128xf32>
    %250 = vector.shape_cast %249 : vector<1x8x128xf32> to vector<8x128xf32>
    %cst_140 = arith.constant dense<0.000000e+00> : vector<8x128xf32>
    %251 = tpu.matmul %228, %3, %cst_140 {dimension_numbers = #tpu.dot_dimension_numbers<[1], [0], [0], [1], [0, 0, 1, 1], [], []>} : vector<8x128xf32>, vector<128x128xf32>, vector<8x128xf32> -> vector<8x128xf32>
    %252 = arith.addf %250, %251 : vector<8x128xf32>
    %253 = math.tanh %252 : vector<8x128xf32>
    %cst_141 = arith.constant 5.000000e-02 : f32
    %254 = vector.broadcast %cst_141 : f32 to vector<8x128xf32>
    %255 = arith.mulf %254, %253 : vector<8x128xf32>
    %256 = arith.addf %225, %255 : vector<8x128xf32>
    %257 = arith.mulf %6, %228 : vector<8x128xf32>
    %258 = arith.subf %256, %257 : vector<8x128xf32>
    %259 = arith.mulf %9, %225 : vector<8x128xf32>
    %260 = arith.subf %258, %259 : vector<8x128xf32>
    %cst_142 = arith.constant 8.000000e-01 : f32
    %261 = vector.broadcast %cst_142 : f32 to vector<8x128xf32>
    %262 = arith.mulf %261, %248 : vector<8x128xf32>
    %263 = arith.subf %260, %262 : vector<8x128xf32>
    %cst_143 = arith.constant 5.000000e-02 : f32
    %264 = vector.broadcast %cst_143 : f32 to vector<8x128xf32>
    %265 = arith.mulf %264, %263 : vector<8x128xf32>
    %266 = arith.addf %228, %265 : vector<8x128xf32>
    %c6_144 = arith.constant 6 : index
    %c0_145 = arith.constant 0 : index
    %c0_146 = arith.constant 0 : index
    %267 = vector.load %arg6[%c6_144, %c0_145, %c0_146] : memref<8x8x512xf32, #tpu.memory_space<vmem>>, vector<1x8x128xf32>
    %268 = vector.shape_cast %267 : vector<1x8x128xf32> to vector<8x128xf32>
    %269 = vector.shape_cast %266 : vector<8x128xf32> to vector<1x8x128xf32>
    tpu.vector_store %arg6[%c6_144, %c0_145, %c0_146], %269 {strides = array<i32>} : memref<8x8x512xf32, #tpu.memory_space<vmem>>, vector<1x8x128xf32>,
    %c6_147 = arith.constant 6 : index
    %c0_148 = arith.constant 0 : index
    %c128_149 = arith.constant 128 : index
    %270 = vector.load %arg6[%c6_147, %c0_148, %c128_149] : memref<8x8x512xf32, #tpu.memory_space<vmem>>, vector<1x8x128xf32>
    %271 = vector.shape_cast %270 : vector<1x8x128xf32> to vector<8x128xf32>
    %272 = vector.shape_cast %263 : vector<8x128xf32> to vector<1x8x128xf32>
    tpu.vector_store %arg6[%c6_147, %c0_148, %c128_149], %272 {strides = array<i32>} : memref<8x8x512xf32, #tpu.memory_space<vmem>>, vector<1x8x128xf32>,
    %c6_150 = arith.constant 6 : index
    %c0_151 = arith.constant 0 : index
    %c256_152 = arith.constant 256 : index
    %273 = vector.load %arg6[%c6_150, %c0_151, %c256_152] : memref<8x8x512xf32, #tpu.memory_space<vmem>>, vector<1x8x128xf32>
    %274 = vector.shape_cast %273 : vector<1x8x128xf32> to vector<8x128xf32>
    %275 = vector.shape_cast %248 : vector<8x128xf32> to vector<1x8x128xf32>
    tpu.vector_store %arg6[%c6_150, %c0_151, %c256_152], %275 {strides = array<i32>} : memref<8x8x512xf32, #tpu.memory_space<vmem>>, vector<1x8x128xf32>,
    %c6_153 = arith.constant 6 : index
    %c0_154 = arith.constant 0 : index
    %c384_155 = arith.constant 384 : index
    %276 = vector.load %arg6[%c6_153, %c0_154, %c384_155] : memref<8x8x512xf32, #tpu.memory_space<vmem>>, vector<1x8x128xf32>
    %277 = vector.shape_cast %276 : vector<1x8x128xf32> to vector<8x128xf32>
    %278 = vector.shape_cast %244 : vector<8x128xf32> to vector<1x8x128xf32>
    tpu.vector_store %arg6[%c6_153, %c0_154, %c384_155], %278 {strides = array<i32>} : memref<8x8x512xf32, #tpu.memory_space<vmem>>, vector<1x8x128xf32>,
    %cst_156 = arith.constant 1.000000e+00 : f32
    %279 = vector.broadcast %cst_156 : f32 to vector<8x128xf32>
    %280 = arith.cmpf ogt, %248, %279 : vector<8x128xf32>
    %281 = arith.extui %280 : vector<8x128xi1> to vector<8x128xi32>
    %282 = arith.sitofp %281 : vector<8x128xi32> to vector<8x128xf32>
    %cst_157 = arith.constant 0.000000e+00 : f32
    %283 = vector.broadcast %cst_157 : f32 to vector<8x128xf32>
    %284 = arith.select %280, %283, %248 : vector<8x128xi1>, vector<8x128xf32>
    %cst_158 = arith.constant 9.750000e-01 : f32
    %285 = vector.broadcast %cst_158 : f32 to vector<8x128xf32>
    %286 = arith.mulf %284, %285 : vector<8x128xf32>
    %c7 = arith.constant 7 : index
    %c0_159 = arith.constant 0 : index
    %c0_160 = arith.constant 0 : index
    %287 = vector.load %arg2[%c7, %c0_159, %c0_160] : memref<8x8x128xf32, #tpu.memory_space<vmem>>, vector<1x8x128xf32>
    %288 = vector.shape_cast %287 : vector<1x8x128xf32> to vector<8x128xf32>
    %cst_161 = arith.constant dense<0.000000e+00> : vector<8x128xf32>
    %289 = tpu.matmul %266, %3, %cst_161 {dimension_numbers = #tpu.dot_dimension_numbers<[1], [0], [0], [1], [0, 0, 1, 1], [], []>} : vector<8x128xf32>, vector<128x128xf32>, vector<8x128xf32> -> vector<8x128xf32>
    %290 = arith.addf %288, %289 : vector<8x128xf32>
    %291 = math.tanh %290 : vector<8x128xf32>
    %cst_162 = arith.constant 5.000000e-02 : f32
    %292 = vector.broadcast %cst_162 : f32 to vector<8x128xf32>
    %293 = arith.mulf %292, %291 : vector<8x128xf32>
    %294 = arith.addf %263, %293 : vector<8x128xf32>
    %295 = arith.mulf %6, %266 : vector<8x128xf32>
    %296 = arith.subf %294, %295 : vector<8x128xf32>
    %297 = arith.mulf %9, %263 : vector<8x128xf32>
    %298 = arith.subf %296, %297 : vector<8x128xf32>
    %cst_163 = arith.constant 8.000000e-01 : f32
    %299 = vector.broadcast %cst_163 : f32 to vector<8x128xf32>
    %300 = arith.mulf %299, %286 : vector<8x128xf32>
    %301 = arith.subf %298, %300 : vector<8x128xf32>
    %cst_164 = arith.constant 5.000000e-02 : f32
    %302 = vector.broadcast %cst_164 : f32 to vector<8x128xf32>
    %303 = arith.mulf %302, %301 : vector<8x128xf32>
    %304 = arith.addf %266, %303 : vector<8x128xf32>
    %c7_165 = arith.constant 7 : index
    %c0_166 = arith.constant 0 : index
    %c0_167 = arith.constant 0 : index
    %305 = vector.load %arg6[%c7_165, %c0_166, %c0_167] : memref<8x8x512xf32, #tpu.memory_space<vmem>>, vector<1x8x128xf32>
    %306 = vector.shape_cast %305 : vector<1x8x128xf32> to vector<8x128xf32>
    %307 = vector.shape_cast %304 : vector<8x128xf32> to vector<1x8x128xf32>
    tpu.vector_store %arg6[%c7_165, %c0_166, %c0_167], %307 {strides = array<i32>} : memref<8x8x512xf32, #tpu.memory_space<vmem>>, vector<1x8x128xf32>,
    %c7_168 = arith.constant 7 : index
    %c0_169 = arith.constant 0 : index
    %c128_170 = arith.constant 128 : index
    %308 = vector.load %arg6[%c7_168, %c0_169, %c128_170] : memref<8x8x512xf32, #tpu.memory_space<vmem>>, vector<1x8x128xf32>
    %309 = vector.shape_cast %308 : vector<1x8x128xf32> to vector<8x128xf32>
    %310 = vector.shape_cast %301 : vector<8x128xf32> to vector<1x8x128xf32>
    tpu.vector_store %arg6[%c7_168, %c0_169, %c128_170], %310 {strides = array<i32>} : memref<8x8x512xf32, #tpu.memory_space<vmem>>, vector<1x8x128xf32>,
    %c7_171 = arith.constant 7 : index
    %c0_172 = arith.constant 0 : index
    %c256_173 = arith.constant 256 : index
    %311 = vector.load %arg6[%c7_171, %c0_172, %c256_173] : memref<8x8x512xf32, #tpu.memory_space<vmem>>, vector<1x8x128xf32>
    %312 = vector.shape_cast %311 : vector<1x8x128xf32> to vector<8x128xf32>
    %313 = vector.shape_cast %286 : vector<8x128xf32> to vector<1x8x128xf32>
    tpu.vector_store %arg6[%c7_171, %c0_172, %c256_173], %313 {strides = array<i32>} : memref<8x8x512xf32, #tpu.memory_space<vmem>>, vector<1x8x128xf32>,
    %c7_174 = arith.constant 7 : index
    %c0_175 = arith.constant 0 : index
    %c384_176 = arith.constant 384 : index
    %314 = vector.load %arg6[%c7_174, %c0_175, %c384_176] : memref<8x8x512xf32, #tpu.memory_space<vmem>>, vector<1x8x128xf32>
    %315 = vector.shape_cast %314 : vector<1x8x128xf32> to vector<8x128xf32>
    %316 = vector.shape_cast %282 : vector<8x128xf32> to vector<1x8x128xf32>
    tpu.vector_store %arg6[%c7_174, %c0_175, %c384_176], %316 {strides = array<i32>} : memref<8x8x512xf32, #tpu.memory_space<vmem>>, vector<1x8x128xf32>,
    %c0_177 = arith.constant 0 : index
    %c0_178 = arith.constant 0 : index
    %317 = vector.load %arg7[%c0_177, %c0_178] : memref<8x128xf32, #tpu.memory_space<vmem>>, vector<8x128xf32>
    tpu.vector_store %arg7[%c0_177, %c0_178], %304 {strides = array<i32>} : memref<8x128xf32, #tpu.memory_space<vmem>>, vector<8x128xf32>,
    %c0_179 = arith.constant 0 : index
    %c0_180 = arith.constant 0 : index
    %318 = vector.load %arg8[%c0_179, %c0_180] : memref<8x128xf32, #tpu.memory_space<vmem>>, vector<8x128xf32>
    tpu.vector_store %arg8[%c0_179, %c0_180], %301 {strides = array<i32>} : memref<8x128xf32, #tpu.memory_space<vmem>>, vector<8x128xf32>,
    %c0_181 = arith.constant 0 : index
    %c0_182 = arith.constant 0 : index
    %319 = vector.load %arg9[%c0_181, %c0_182] : memref<8x128xf32, #tpu.memory_space<vmem>>, vector<8x128xf32>
    tpu.vector_store %arg9[%c0_181, %c0_182], %286 {strides = array<i32>} : memref<8x128xf32, #tpu.memory_space<vmem>>, vector<8x128xf32>,
    return
  }
  func.func @transform_0(%arg0: i32, %arg1: i32) -> (i32, i32, i32) {
    %c0_i32 = arith.constant 0 : i32
    %c0_i32_0 = arith.constant 0 : i32
    return %arg1, %arg0, %c0_i32 : i32, i32, i32
  }
  func.func @transform_1(%arg0: i32, %arg1: i32) -> (i32, i32) {
    %c0_i32 = arith.constant 0 : i32
    %c0_i32_0 = arith.constant 0 : i32
    %c0_i32_1 = arith.constant 0 : i32
    return %c0_i32, %c0_i32_0 : i32, i32
  }
  func.func @transform_2(%arg0: i32, %arg1: i32) -> (i32, i32) {
    %c0_i32 = arith.constant 0 : i32
    %c0_i32_0 = arith.constant 0 : i32
    %c0_i32_1 = arith.constant 0 : i32
    return %c0_i32, %c0_i32_0 : i32, i32
  }
  func.func @transform_3(%arg0: i32, %arg1: i32) -> (i32, i32) {
    %c0_i32 = arith.constant 0 : i32
    %c0_i32_0 = arith.constant 0 : i32
    %c0_i32_1 = arith.constant 0 : i32
    return %c0_i32, %c0_i32_0 : i32, i32
  }
  func.func @transform_4(%arg0: i32, %arg1: i32) -> (i32, i32, i32) {
    %c0_i32 = arith.constant 0 : i32
    %c0_i32_0 = arith.constant 0 : i32
    return %arg1, %arg0, %c0_i32 : i32, i32, i32
  }
}

</mosaic_0001>

<llo_original>
// kernel: tpu_custom_call.1
$region0: #{tpu_custom_call.1}
  #allocation0 [shape = 'u32[]', space=smem, size = 0x4, offset = 0x4, fixed_abs, tag = 'smem constant byte address 0x4 - core index']
  #allocation1 [shape = 'u32[144,128]{1,0:T(1,128)}', space=vmem, size = 0x12000, scoped, tag = 'internal scratch']
  #allocation2 [shape = 'f32[8,128]{1,0:T(8,128)}', space=vmem, size = 0x1000, scoped, tag = 'scratch operand']
  #allocation3 [shape = 'f32[8,128]{1,0:T(8,128)}', space=vmem, size = 0x1000, scoped, tag = 'scratch operand']
  #allocation4 [shape = 'f32[8,128]{1,0:T(8,128)}', space=vmem, size = 0x1000, scoped, tag = 'scratch operand']
  %s0 = inlined_call_operand.hbm [shape: f32[8,8,128], index: 0, kind: input, shape index: {}]
  %s1 = inlined_call_operand.hbm [shape: f32[128,128], index: 1, kind: input, shape index: {}]
  %s2 = inlined_call_operand.vmem [shape: f32[1,128], index: 2, kind: input, shape index: {}]
  %s3 = inlined_call_operand.vmem [shape: f32[1,128], index: 3, kind: input, shape index: {}]
  %s4 = inlined_call_operand.hbm [shape: f32[8,8,512], index: 4, kind: output, shape index: {}]
  %s5 = sld [smem:[#allocation0]]
  $region38: #{tpu_custom_call.1} parent=0
    _
  %s7 = ssub.s32 1, %s5
  %s8 = scalar_select 0, %s7, %s5
  $region1: #{tpu_custom_call.1} parent=0
    #allocation5 [shape = 'u8[32768]{0}', space=vmem, size = 0x8000, scoped, tag = 'input window, operand 0, single buffered']
    #allocation6 [shape = 's32[1]{0}', space=sflag, size = 0x4, scoped, tag = 'scoped memory for tpu_custom_call.1']
    #allocation7 [shape = 's32[1]{0}', space=sflag, size = 0x4, scoped, tag = 'scoped memory for tpu_custom_call.1']
    #allocation8 [shape = 'u8[65536]{0}', space=vmem, size = 0x10000, scoped, tag = 'input window, operand 1, single buffered']
    #allocation9 [shape = 's32[1]{0}', space=sflag, size = 0x4, scoped, tag = 'scoped memory for tpu_custom_call.1']
    #allocation10 [shape = 'u8[131072]{0}', space=vmem, size = 0x20000, scoped, tag = 'output window, operand 0, single buffered']
    %9 = vsyncpa [#allocation6], 0
    %10 = vsyncpa [#allocation9], 0
    %11 = vsyncpa [#allocation7], 0
    // Predicated region
    $region2: #{tpu_custom_call.1} parent=1 // pred_check
      _
    $region3: #{tpu_custom_call.1} parent=1 // pred_check_branch
      %13 = sbr.rel (0) target = $region5
    $region4: #{tpu_custom_call.1} parent=1 // pred_region
      %s15 = ssub.s32 1024, 1024
      %16 = vsyncadd [#allocation6], %s15
      %s17 = sshll.u32 [#allocation5], 4
      %s18 = int_to_ptr.vmem [resolvable:$true] %s17
      %23 = dma.hbm_to_vmem [thread:$0]  %s0, 1024, %s18, [#allocation6], 128, 128, 8
    $region5: #{tpu_custom_call.1} parent=1 // pred_fallthru
      _
    // Predicated region
    $region6: #{tpu_custom_call.1} parent=1 // pred_check
      _
    $region7: #{tpu_custom_call.1} parent=1 // pred_check_branch
      %25 = sbr.rel (0) target = $region9
    $region8: #{tpu_custom_call.1} parent=1 // pred_region
      %s27 = ssub.s32 2048, 2048
      %28 = vsyncadd [#allocation9], %s27
      %s29 = sshll.u32 [#allocation8], 4
      %s30 = int_to_ptr.vmem [resolvable:$true] %s29
      %35 = dma.hbm_to_vmem [thread:$0]  %s1, 2048, %s30, [#allocation9], 128, 128, 8
    $region9: #{tpu_custom_call.1} parent=1 // pred_fallthru
      _
    // Predicated region
    $region10: #{tpu_custom_call.1} parent=1 // pred_check
      _
    $region11: #{tpu_custom_call.1} parent=1 // pred_check_branch
      %37 = sbr.rel (0) target = $region13
    $region12: #{tpu_custom_call.1} parent=1 // pred_region
      _
    $region13: #{tpu_custom_call.1} parent=1 // pred_fallthru
      _
    // Predicated region
    $region14: #{tpu_custom_call.1} parent=1 // pred_check
      _
    $region15: #{tpu_custom_call.1} parent=1 // pred_check_branch
      %39 = sbr.rel (0) target = $region17
    $region16: #{tpu_custom_call.1} parent=1 // pred_region
      _
    $region17: #{tpu_custom_call.1} parent=1 // pred_fallthru
      _
    // Predicated region
    $region18: #{tpu_custom_call.1} parent=1 // pred_check
      _
    $region19: #{tpu_custom_call.1} parent=1 // pred_check_branch
      %41 = sbr.rel (0) target = $region21
    $region20: #{tpu_custom_call.1} parent=1 // pred_region
      %42 = dma.done [#allocation6], 1024
    $region21: #{tpu_custom_call.1} parent=1 // pred_fallthru
      _
    // Predicated region
    $region22: #{tpu_custom_call.1} parent=1 // pred_check
      _
    $region23: #{tpu_custom_call.1} parent=1 // pred_check_branch
      %44 = sbr.rel (0) target = $region25
    $region24: #{tpu_custom_call.1} parent=1 // pred_region
      %45 = dma.done [#allocation9], 2048
    $region25: #{tpu_custom_call.1} parent=1 // pred_fallthru
      _
    %p46 = scmp.eq.s32.totalorder 0, 0
    // Predicated region
    $region26: #{tpu_custom_call.1} parent=1 // pred_check
      %p47 = pneg %p46
    $region27: #{tpu_custom_call.1} parent=1 // pred_check_branch
      %49 = sbr.rel (%p47) target = $region29
    $region28: #{tpu_custom_call.1} parent=1 // pred_region
      %50 = vst [vmem:[#allocation2] sm:$0xff] 0.0
      %51 = vst [vmem:[#allocation3] sm:$0xff] 0.0
      %52 = vst [vmem:[#allocation4] sm:$0xff] 0.0
    $region29: #{tpu_custom_call.1} parent=1 // pred_fallthru
      _
    %v53 = vld [vmem:[#allocation8] sm:$0xff]
    %v54 = vld [vmem:[#allocation8 + $0x8] sm:$0xff]
    %v55 = vld [vmem:[#allocation8 + $0x10] sm:$0xff]
    %v56 = vld [vmem:[#allocation8 + $0x18] sm:$0xff]
    %v57 = vld [vmem:[#allocation8 + $0x20] sm:$0xff]
    %v58 = vld [vmem:[#allocation8 + $0x28] sm:$0xff]
    %v59 = vld [vmem:[#allocation8 + $0x30] sm:$0xff]
    %v60 = vld [vmem:[#allocation8 + $0x38] sm:$0xff]
    %v61 = vld [vmem:[#allocation8 + $0x40] sm:$0xff]
    %v62 = vld [vmem:[#allocation8 + $0x48] sm:$0xff]
    %v63 = vld [vmem:[#allocation8 + $0x50] sm:$0xff]
    %v64 = vld [vmem:[#allocation8 + $0x58] sm:$0xff]
    %v65 = vld [vmem:[#allocation8 + $0x60] sm:$0xff]
    %v66 = vld [vmem:[#allocation8 + $0x68] sm:$0xff]
    %v67 = vld [vmem:[#allocation8 + $0x70] sm:$0xff]
    %v68 = vld [vmem:[#allocation8 + $0x78] sm:$0xff]
    %v69 = vld [vmem:[%s2] sm:$0x1]
    %v71 = vlaneseq
    %v72 = vshrl.u32 %v71, 7
    %v73 = vsub.s32 0, %v72
    %v74 = vrot.slane %v69, %v73
    %v76 = vld [vmem:[%s3] sm:$0x1]
    %v78 = vlaneseq
    %v79 = vshrl.u32 %v78, 7
    %v80 = vsub.s32 0, %v79
    %v81 = vrot.slane %v76, %v80
    %v83 = vld [vmem:[#allocation2] sm:$0xff]
    %v84 = vld [vmem:[#allocation3] sm:$0xff]
    %v85 = vld [vmem:[#allocation4] sm:$0xff]
    %vm86 = vcmp.gt.f32.partialorder %v85, 1.0
    %v87 = vsel %vm86, 1, 0
    %v88 = vcvt.s32.f32 %v87
    %v89 = vsel %vm86, 0.0, %v85
    %v90 = vmul.f32 %v89, 0.975
    %v91 = vld [vmem:[#allocation5] sm:$0xff]
    %92 = vmatprep.subr.mxu0 0.0
    %93 = vmatpush1.msra.mxu0 %v53
    %94 = vmatprep.subr.mxu0 0.0
    %95 = vmatpush1.msra.mxu0 %v54
    %96 = vmatprep.subr.mxu0 0.0
    %97 = vmatpush1.msra.mxu0 %v55
    %98 = vmatprep.subr.mxu0 0.0
    %99 = vmatpush1.msra.mxu0 %v56
    %100 = vmatprep.subr.mxu0 0.0
    %101 = vmatpush1.msra.mxu0 %v57
    %102 = vmatprep.subr.mxu0 0.0
    %103 = vmatpush1.msra.mxu0 %v58
    %104 = vmatprep.subr.mxu0 0.0
    %105 = vmatpush1.msra.mxu0 %v59
    %106 = vmatprep.subr.mxu0 0.0
    %107 = vmatpush1.msra.mxu0 %v60
    %108 = vmatprep.subr.mxu0 0.0
    %109 = vmatpush1.msra.mxu0 %v61
    %110 = vmatprep.subr.mxu0 0.0
    %111 = vmatpush1.msra.mxu0 %v62
    %112 = vmatprep.subr.mxu0 0.0
    %113 = vmatpush1.msra.mxu0 %v63
    %114 = vmatprep.subr.mxu0 0.0
    %115 = vmatpush1.msra.mxu0 %v64
    %116 = vmatprep.subr.mxu0 0.0
    %117 = vmatpush1.msra.mxu0 %v65
    %118 = vmatprep.subr.mxu0 0.0
    %119 = vmatpush1.msra.mxu0 %v66
    %120 = vmatprep.subr.mxu0 0.0
    %121 = vmatpush1.msra.mxu0 %v67
    %122 = vmatprep.subr.mxu0 0.0
    %123 = vmatpush1.msra.mxu0 %v68
    %124 = vmatprep.subr.mxu0 0.0
    %125 = vmatpush1.msra.mxu0 0.0
    %126 = vmatprep.subr.mxu0 0.0
    %127 = vmatpush1.msra.mxu0 0.0
    %128 = vmatprep.subr.mxu0 0.0
    %129 = vmatpush1.msra.mxu0 0.0
    %130 = vmatprep.subr.mxu0 0.0
    %131 = vmatpush1.msra.mxu0 0.0
    %132 = vmatprep.subr.mxu0 0.0
    %133 = vmatpush1.msra.mxu0 0.0
    %134 = vmatprep.subr.mxu0 0.0
    %135 = vmatpush1.msra.mxu0 0.0
    %136 = vmatprep.subr.mxu0 0.0
    %137 = vmatpush1.msra.mxu0 0.0
    %138 = vmatprep.subr.mxu0 0.0
    %139 = vmatpush1.msra.mxu0 0.0
    %140 = vmatprep.subr.mxu0 0.0
    %141 = vmatpush1.msra.mxu0 0.0
    %142 = vmatprep.subr.mxu0 0.0
    %143 = vmatpush1.msra.mxu0 0.0
    %144 = vmatprep.subr.mxu0 0.0
    %145 = vmatpush1.msra.mxu0 0.0
    %146 = vmatprep.subr.mxu0 0.0
    %147 = vmatpush1.msra.mxu0 0.0
    %148 = vmatprep.subr.mxu0 0.0
    %149 = vmatpush1.msra.mxu0 0.0
    %150 = vmatprep.subr.mxu0 0.0
    %151 = vmatpush1.msra.mxu0 0.0
    %152 = vmatprep.subr.mxu0 0.0
    %153 = vmatpush1.msra.mxu0 0.0
    %154 = vmatprep.subr.mxu0 0.0
    %155 = vmatpush1.msra.mxu0 0.0
    %156 = vmatprep.mubr.f32.mxu0 0.0
    %157 = vmatmul.mubr.f32.gmra.mrb[0].mxu0 %v83
    %v158 = vpop.f32.mrb[0].mxu0
    %v159 = vadd.f32 0.0, %v158
    %v160 = vpop.f32.mrb[0].mxu0
    %161 = vdwg.mxu0
    %v162 = vadd.f32 %v91, %v159
    %v163 = vtanh.pop %v162
    %v164 = vmul.f32 %v163, 0.05
    %v165 = vadd.f32 %v84, %v164
    %v166 = vmul.f32 %v74, %v83
    %v167 = vsub.f32 %v165, %v166
    %v168 = vmul.f32 %v81, %v84
    %v169 = vsub.f32 %v167, %v168
    %v170 = vmul.f32 %v90, 0.8
    %v171 = vsub.f32 %v169, %v170
    %v172 = vmul.f32 %v171, 0.05
    %v173 = vadd.f32 %v83, %v172
    %174 = vst [vmem:[#allocation10] sm:$0xff] %v173
    %175 = vst [vmem:[#allocation10 + $0x8] sm:$0xff] %v171
    %176 = vst [vmem:[#allocation10 + $0x10] sm:$0xff] %v90
    %177 = vst [vmem:[#allocation10 + $0x18] sm:$0xff] %v88
    %vm178 = vcmp.gt.f32.partialorder %v90, 1.0
    %v179 = vsel %vm178, 1, 0
    %v180 = vcvt.s32.f32 %v179
    %v181 = vsel %vm178, 0.0, %v90
    %v182 = vmul.f32 %v181, 0.975
    %s183 = scalar_lea.vmem [#allocation5], 8
    %v184 = vld [vmem:[%s183] sm:$0xff]
    %185 = vmatprep.subr.mxu0 0.0
    %186 = vmatpush1.msra.mxu0 %v53
    %187 = vmatprep.subr.mxu0 0.0
    %188 = vmatpush1.msra.mxu0 %v54
    %189 = vmatprep.subr.mxu0 0.0
    %190 = vmatpush1.msra.mxu0 %v55
    %191 = vmatprep.subr.mxu0 0.0
    %192 = vmatpush1.msra.mxu0 %v56
    %193 = vmatprep.subr.mxu0 0.0
    %194 = vmatpush1.msra.mxu0 %v57
    %195 = vmatprep.subr.mxu0 0.0
    %196 = vmatpush1.msra.mxu0 %v58
    %197 = vmatprep.subr.mxu0 0.0
    %198 = vmatpush1.msra.mxu0 %v59
    %199 = vmatprep.subr.mxu0 0.0
    %200 = vmatpush1.msra.mxu0 %v60
    %201 = vmatprep.subr.mxu0 0.0
    %202 = vmatpush1.msra.mxu0 %v61
    %203 = vmatprep.subr.mxu0 0.0
    %204 = vmatpush1.msra.mxu0 %v62
    %205 = vmatprep.subr.mxu0 0.0
    %206 = vmatpush1.msra.mxu0 %v63
    %207 = vmatprep.subr.mxu0 0.0
    %208 = vmatpush1.msra.mxu0 %v64
    %209 = vmatprep.subr.mxu0 0.0
    %210 = vmatpush1.msra.mxu0 %v65
    %211 = vmatprep.subr.mxu0 0.0
    %212 = vmatpush1.msra.mxu0 %v66
    %213 = vmatprep.subr.mxu0 0.0
    %214 = vmatpush1.msra.mxu0 %v67
    %215 = vmatprep.subr.mxu0 0.0
    %216 = vmatpush1.msra.mxu0 %v68
    %217 = vmatprep.subr.mxu0 0.0
    %218 = vmatpush1.msra.mxu0 0.0
    %219 = vmatprep.subr.mxu0 0.0
    %220 = vmatpush1.msra.mxu0 0.0
    %221 = vmatprep.subr.mxu0 0.0
    %222 = vmatpush1.msra.mxu0 0.0
    %223 = vmatprep.subr.mxu0 0.0
    %224 = vmatpush1.msra.mxu0 0.0
    %225 = vmatprep.subr.mxu0 0.0
    %226 = vmatpush1.msra.mxu0 0.0
    %227 = vmatprep.subr.mxu0 0.0
    %228 = vmatpush1.msra.mxu0 0.0
    %229 = vmatprep.subr.mxu0 0.0
    %230 = vmatpush1.msra.mxu0 0.0
    %231 = vmatprep.subr.mxu0 0.0
    %232 = vmatpush1.msra.mxu0 0.0
    %233 = vmatprep.subr.mxu0 0.0
    %234 = vmatpush1.msra.mxu0 0.0
    %235 = vmatprep.subr.mxu0 0.0
    %236 = vmatpush1.msra.mxu0 0.0
    %237 = vmatprep.subr.mxu0 0.0
    %238 = vmatpush1.msra.mxu0 0.0
    %239 = vmatprep.subr.mxu0 0.0
    %240 = vmatpush1.msra.mxu0 0.0
    %241 = vmatprep.subr.mxu0 0.0
    %242 = vmatpush1.msra.mxu0 0.0
    %243 = vmatprep.subr.mxu0 0.0
    %244 = vmatpush1.msra.mxu0 0.0
    %245 = vmatprep.subr.mxu0 0.0
    %246 = vmatpush1.msra.mxu0 0.0
    %247 = vmatprep.subr.mxu0 0.0
    %248 = vmatpush1.msra.mxu0 0.0
    %249 = vmatprep.mubr.f32.mxu0 0.0
    %250 = vmatmul.mubr.f32.gmra.mrb[0].mxu0 %v173
    %v251 = vpop.f32.mrb[0].mxu0
    %v252 = vadd.f32 0.0, %v251
    %v253 = vpop.f32.mrb[0].mxu0
    %254 = vdwg.mxu0
    %v255 = vadd.f32 %v184, %v252
    %v256 = vtanh.pop %v255
    %v257 = vmul.f32 %v256, 0.05
    %v258 = vadd.f32 %v171, %v257
    %v259 = vmul.f32 %v74, %v173
    %v260 = vsub.f32 %v258, %v259
    %v261 = vmul.f32 %v81, %v171
    %v262 = vsub.f32 %v260, %v261
    %v263 = vmul.f32 %v182, 0.8
    %v264 = vsub.f32 %v262, %v263
    %v265 = vmul.f32 %v264, 0.05
    %v266 = vadd.f32 %v173, %v265
    %s267 = scalar_lea.vmem [#allocation10], 32
    %268 = vst [vmem:[%s267] sm:$0xff] %v266
    %269 = vst [vmem:[%s267 + $0x8] sm:$0xff] %v264
    %270 = vst [vmem:[%s267 + $0x10] sm:$0xff] %v182
    %271 = vst [vmem:[%s267 + $0x18] sm:$0xff] %v180
    %vm272 = vcmp.gt.f32.partialorder %v182, 1.0
    %v273 = vsel %vm272, 1, 0
    %v274 = vcvt.s32.f32 %v273
    %v275 = vsel %vm272, 0.0, %v182
    %v276 = vmul.f32 %v275, 0.975
    %s277 = scalar_lea.vmem [#allocation5], 16
    %v278 = vld [vmem:[%s277] sm:$0xff]
    %279 = vmatprep.subr.mxu0 0.0
    %280 = vmatpush1.msra.mxu0 %v53
    %281 = vmatprep.subr.mxu0 0.0
    %282 = vmatpush1.msra.mxu0 %v54
    %283 = vmatprep.subr.mxu0 0.0
    %284 = vmatpush1.msra.mxu0 %v55
    %285 = vmatprep.subr.mxu0 0.0
    %286 = vmatpush1.msra.mxu0 %v56
    %287 = vmatprep.subr.mxu0 0.0
    %288 = vmatpush1.msra.mxu0 %v57
    %289 = vmatprep.subr.mxu0 0.0
    %290 = vmatpush1.msra.mxu0 %v58
    %291 = vmatprep.subr.mxu0 0.0
    %292 = vmatpush1.msra.mxu0 %v59
    %293 = vmatprep.subr.mxu0 0.0
    %294 = vmatpush1.msra.mxu0 %v60
    %295 = vmatprep.subr.mxu0 0.0
    %296 = vmatpush1.msra.mxu0 %v61
    %297 = vmatprep.subr.mxu0 0.0
    %298 = vmatpush1.msra.mxu0 %v62
    %299 = vmatprep.subr.mxu0 0.0
    %300 = vmatpush1.msra.mxu0 %v63
    %301 = vmatprep.subr.mxu0 0.0
    %302 = vmatpush1.msra.mxu0 %v64
    %303 = vmatprep.subr.mxu0 0.0
    %304 = vmatpush1.msra.mxu0 %v65
    %305 = vmatprep.subr.mxu0 0.0
    %306 = vmatpush1.msra.mxu0 %v66
    %307 = vmatprep.subr.mxu0 0.0
    %308 = vmatpush1.msra.mxu0 %v67
    %309 = vmatprep.subr.mxu0 0.0
    %310 = vmatpush1.msra.mxu0 %v68
    %311 = vmatprep.subr.mxu0 0.0
    %312 = vmatpush1.msra.mxu0 0.0
    %313 = vmatprep.subr.mxu0 0.0
    %314 = vmatpush1.msra.mxu0 0.0
    %315 = vmatprep.subr.mxu0 0.0
    %316 = vmatpush1.msra.mxu0 0.0
    %317 = vmatprep.subr.mxu0 0.0
    %318 = vmatpush1.msra.mxu0 0.0
    %319 = vmatprep.subr.mxu0 0.0
    %320 = vmatpush1.msra.mxu0 0.0
    %321 = vmatprep.subr.mxu0 0.0
    %322 = vmatpush1.msra.mxu0 0.0
    %323 = vmatprep.subr.mxu0 0.0
    %324 = vmatpush1.msra.mxu0 0.0
    %325 = vmatprep.subr.mxu0 0.0
    %326 = vmatpush1.msra.mxu0 0.0
    %327 = vmatprep.subr.mxu0 0.0
    %328 = vmatpush1.msra.mxu0 0.0
    %329 = vmatprep.subr.mxu0 0.0
    %330 = vmatpush1.msra.mxu0 0.0
    %331 = vmatprep.subr.mxu0 0.0
    %332 = vmatpush1.msra.mxu0 0.0
    %333 = vmatprep.subr.mxu0 0.0
    %334 = vmatpush1.msra.mxu0 0.0
    %335 = vmatprep.subr.mxu0 0.0
    %336 = vmatpush1.msra.mxu0 0.0
    %337 = vmatprep.subr.mxu0 0.0
    %338 = vmatpush1.msra.mxu0 0.0
    %339 = vmatprep.subr.mxu0 0.0
    %340 = vmatpush1.msra.mxu0 0.0
    %341 = vmatprep.subr.mxu0 0.0
    %342 = vmatpush1.msra.mxu0 0.0
    %343 = vmatprep.mubr.f32.mxu0 0.0
    %344 = vmatmul.mubr.f32.gmra.mrb[0].mxu0 %v266
    %v345 = vpop.f32.mrb[0].mxu0
    %v346 = vadd.f32 0.0, %v345
    %v347 = vpop.f32.mrb[0].mxu0
    %348 = vdwg.mxu0
    %v349 = vadd.f32 %v278, %v346
    %v350 = vtanh.pop %v349
    %v351 = vmul.f32 %v350, 0.05
    %v352 = vadd.f32 %v264, %v351
    %v353 = vmul.f32 %v74, %v266
    %v354 = vsub.f32 %v352, %v353
    %v355 = vmul.f32 %v81, %v264
    %v356 = vsub.f32 %v354, %v355
    %v357 = vmul.f32 %v276, 0.8
    %v358 = vsub.f32 %v356, %v357
    %v359 = vmul.f32 %v358, 0.05
    %v360 = vadd.f32 %v266, %v359
    %s361 = scalar_lea.vmem [#allocation10], 64
    %362 = vst [vmem:[%s361] sm:$0xff] %v360
    %363 = vst [vmem:[%s361 + $0x8] sm:$0xff] %v358
    %364 = vst [vmem:[%s361 + $0x10] sm:$0xff] %v276
    %365 = vst [vmem:[%s361 + $0x18] sm:$0xff] %v274
    %vm366 = vcmp.gt.f32.partialorder %v276, 1.0
    %v367 = vsel %vm366, 1, 0
    %v368 = vcvt.s32.f32 %v367
    %v369 = vsel %vm366, 0.0, %v276
    %v370 = vmul.f32 %v369, 0.975
    %s371 = scalar_lea.vmem [#allocation5], 24
    %v372 = vld [vmem:[%s371] sm:$0xff]
    %373 = vmatprep.subr.mxu0 0.0
    %374 = vmatpush1.msra.mxu0 %v53
    %375 = vmatprep.subr.mxu0 0.0
    %376 = vmatpush1.msra.mxu0 %v54
    %377 = vmatprep.subr.mxu0 0.0
    %378 = vmatpush1.msra.mxu0 %v55
    %379 = vmatprep.subr.mxu0 0.0
    %380 = vmatpush1.msra.mxu0 %v56
    %381 = vmatprep.subr.mxu0 0.0
    %382 = vmatpush1.msra.mxu0 %v57
    %383 = vmatprep.subr.mxu0 0.0
    %384 = vmatpush1.msra.mxu0 %v58
    %385 = vmatprep.subr.mxu0 0.0
    %386 = vmatpush1.msra.mxu0 %v59
    %387 = vmatprep.subr.mxu0 0.0
    %388 = vmatpush1.msra.mxu0 %v60
    %389 = vmatprep.subr.mxu0 0.0
    %390 = vmatpush1.msra.mxu0 %v61
    %391 = vmatprep.subr.mxu0 0.0
    %392 = vmatpush1.msra.mxu0 %v62
    %393 = vmatprep.subr.mxu0 0.0
    %394 = vmatpush1.msra.mxu0 %v63
    %395 = vmatprep.subr.mxu0 0.0
    %396 = vmatpush1.msra.mxu0 %v64
    %397 = vmatprep.subr.mxu0 0.0
    %398 = vmatpush1.msra.mxu0 %v65
    %399 = vmatprep.subr.mxu0 0.0
    %400 = vmatpush1.msra.mxu0 %v66
    %401 = vmatprep.subr.mxu0 0.0
    %402 = vmatpush1.msra.mxu0 %v67
    %403 = vmatprep.subr.mxu0 0.0
    %404 = vmatpush1.msra.mxu0 %v68
    %405 = vmatprep.subr.mxu0 0.0
    %406 = vmatpush1.msra.mxu0 0.0
    %407 = vmatprep.subr.mxu0 0.0
    %408 = vmatpush1.msra.mxu0 0.0
    %409 = vmatprep.subr.mxu0 0.0
    %410 = vmatpush1.msra.mxu0 0.0
    %411 = vmatprep.subr.mxu0 0.0
    %412 = vmatpush1.msra.mxu0 0.0
    %413 = vmatprep.subr.mxu0 0.0
    %414 = vmatpush1.msra.mxu0 0.0
    %415 = vmatprep.subr.mxu0 0.0
    %416 = vmatpush1.msra.mxu0 0.0
    %417 = vmatprep.subr.mxu0 0.0
    %418 = vmatpush1.msra.mxu0 0.0
    %419 = vmatprep.subr.mxu0 0.0
    %420 = vmatpush1.msra.mxu0 0.0
    %421 = vmatprep.subr.mxu0 0.0
    %422 = vmatpush1.msra.mxu0 0.0
    %423 = vmatprep.subr.mxu0 0.0
    %424 = vmatpush1.msra.mxu0 0.0
    %425 = vmatprep.subr.mxu0 0.0
    %426 = vmatpush1.msra.mxu0 0.0
    %427 = vmatprep.subr.mxu0 0.0
    %428 = vmatpush1.msra.mxu0 0.0
    %429 = vmatprep.subr.mxu0 0.0
    %430 = vmatpush1.msra.mxu0 0.0
    %431 = vmatprep.subr.mxu0 0.0
    %432 = vmatpush1.msra.mxu0 0.0
    %433 = vmatprep.subr.mxu0 0.0
    %434 = vmatpush1.msra.mxu0 0.0
    %435 = vmatprep.subr.mxu0 0.0
    %436 = vmatpush1.msra.mxu0 0.0
    %437 = vmatprep.mubr.f32.mxu0 0.0
    %438 = vmatmul.mubr.f32.gmra.mrb[0].mxu0 %v360
    %v439 = vpop.f32.mrb[0].mxu0
    %v440 = vadd.f32 0.0, %v439
    %v441 = vpop.f32.mrb[0].mxu0
    %442 = vdwg.mxu0
    %v443 = vadd.f32 %v372, %v440
    %v444 = vtanh.pop %v443
    %v445 = vmul.f32 %v444, 0.05
    %v446 = vadd.f32 %v358, %v445
    %v447 = vmul.f32 %v74, %v360
    %v448 = vsub.f32 %v446, %v447
    %v449 = vmul.f32 %v81, %v358
    %v450 = vsub.f32 %v448, %v449
    %v451 = vmul.f32 %v370, 0.8
    %v452 = vsub.f32 %v450, %v451
    %v453 = vmul.f32 %v452, 0.05
    %v454 = vadd.f32 %v360, %v453
    %s455 = scalar_lea.vmem [#allocation10], 96
    %456 = vst [vmem:[%s455] sm:$0xff] %v454
    %457 = vst [vmem:[%s455 + $0x8] sm:$0xff] %v452
    %458 = vst [vmem:[%s455 + $0x10] sm:$0xff] %v370
    %459 = vst [vmem:[%s455 + $0x18] sm:$0xff] %v368
    %vm460 = vcmp.gt.f32.partialorder %v370, 1.0
    %v461 = vsel %vm460, 1, 0
    %v462 = vcvt.s32.f32 %v461
    %v463 = vsel %vm460, 0.0, %v370
    %v464 = vmul.f32 %v463, 0.975
    %s465 = scalar_lea.vmem [#allocation5], 32
    %v466 = vld [vmem:[%s465] sm:$0xff]
    %467 = vmatprep.subr.mxu0 0.0
    %468 = vmatpush1.msra.mxu0 %v53
    %469 = vmatprep.subr.mxu0 0.0
    %470 = vmatpush1.msra.mxu0 %v54
    %471 = vmatprep.subr.mxu0 0.0
    %472 = vmatpush1.msra.mxu0 %v55
    %473 = vmatprep.subr.mxu0 0.0
    %474 = vmatpush1.msra.mxu0 %v56
    %475 = vmatprep.subr.mxu0 0.0
    %476 = vmatpush1.msra.mxu0 %v57
    %477 = vmatprep.subr.mxu0 0.0
    %478 = vmatpush1.msra.mxu0 %v58
    %479 = vmatprep.subr.mxu0 0.0
    %480 = vmatpush1.msra.mxu0 %v59
    %481 = vmatprep.subr.mxu0 0.0
    %482 = vmatpush1.msra.mxu0 %v60
    %483 = vmatprep.subr.mxu0 0.0
    %484 = vmatpush1.msra.mxu0 %v61
    %485 = vmatprep.subr.mxu0 0.0
    %486 = vmatpush1.msra.mxu0 %v62
    %487 = vmatprep.subr.mxu0 0.0
    %488 = vmatpush1.msra.mxu0 %v63
    %489 = vmatprep.subr.mxu0 0.0
    %490 = vmatpush1.msra.mxu0 %v64
    %491 = vmatprep.subr.mxu0 0.0
    %492 = vmatpush1.msra.mxu0 %v65
    %493 = vmatprep.subr.mxu0 0.0
    %494 = vmatpush1.msra.mxu0 %v66
    %495 = vmatprep.subr.mxu0 0.0
    %496 = vmatpush1.msra.mxu0 %v67
    %497 = vmatprep.subr.mxu0 0.0
    %498 = vmatpush1.msra.mxu0 %v68
    %499 = vmatprep.subr.mxu0 0.0
    %500 = vmatpush1.msra.mxu0 0.0
    %501 = vmatprep.subr.mxu0 0.0
    %502 = vmatpush1.msra.mxu0 0.0
    %503 = vmatprep.subr.mxu0 0.0
    %504 = vmatpush1.msra.mxu0 0.0
    %505 = vmatprep.subr.mxu0 0.0
    %506 = vmatpush1.msra.mxu0 0.0
    %507 = vmatprep.subr.mxu0 0.0
    %508 = vmatpush1.msra.mxu0 0.0
    %509 = vmatprep.subr.mxu0 0.0
    %510 = vmatpush1.msra.mxu0 0.0
    %511 = vmatprep.subr.mxu0 0.0
    %512 = vmatpush1.msra.mxu0 0.0
    %513 = vmatprep.subr.mxu0 0.0
    %514 = vmatpush1.msra.mxu0 0.0
    %515 = vmatprep.subr.mxu0 0.0
    %516 = vmatpush1.msra.mxu0 0.0
    %517 = vmatprep.subr.mxu0 0.0
    %518 = vmatpush1.msra.mxu0 0.0
    %519 = vmatprep.subr.mxu0 0.0
    %520 = vmatpush1.msra.mxu0 0.0
    %521 = vmatprep.subr.mxu0 0.0
    %522 = vmatpush1.msra.mxu0 0.0
    %523 = vmatprep.subr.mxu0 0.0
    %524 = vmatpush1.msra.mxu0 0.0
    %525 = vmatprep.subr.mxu0 0.0
    %526 = vmatpush1.msra.mxu0 0.0
    %527 = vmatprep.subr.mxu0 0.0
    %528 = vmatpush1.msra.mxu0 0.0
    %529 = vmatprep.subr.mxu0 0.0
    %530 = vmatpush1.msra.mxu0 0.0
    %531 = vmatprep.mubr.f32.mxu0 0.0
    %532 = vmatmul.mubr.f32.gmra.mrb[0].mxu0 %v454
    %v533 = vpop.f32.mrb[0].mxu0
    %v534 = vadd.f32 0.0, %v533
    %v535 = vpop.f32.mrb[0].mxu0
    %536 = vdwg.mxu0
    %v537 = vadd.f32 %v466, %v534
    %v538 = vtanh.pop %v537
    %v539 = vmul.f32 %v538, 0.05
    %v540 = vadd.f32 %v452, %v539
    %v541 = vmul.f32 %v74, %v454
    %v542 = vsub.f32 %v540, %v541
    %v543 = vmul.f32 %v81, %v452
    %v544 = vsub.f32 %v542, %v543
    %v545 = vmul.f32 %v464, 0.8
    %v546 = vsub.f32 %v544, %v545
    %v547 = vmul.f32 %v546, 0.05
    %v548 = vadd.f32 %v454, %v547
    %s549 = scalar_lea.vmem [#allocation10], 128
    %550 = vst [vmem:[%s549] sm:$0xff] %v548
    %551 = vst [vmem:[%s549 + $0x8] sm:$0xff] %v546
    %552 = vst [vmem:[%s549 + $0x10] sm:$0xff] %v464
    %553 = vst [vmem:[%s549 + $0x18] sm:$0xff] %v462
    %vm554 = vcmp.gt.f32.partialorder %v464, 1.0
    %v555 = vsel %vm554, 1, 0
    %v556 = vcvt.s32.f32 %v555
    %v557 = vsel %vm554, 0.0, %v464
    %v558 = vmul.f32 %v557, 0.975
    %s559 = scalar_lea.vmem [#allocation5], 40
    %v560 = vld [vmem:[%s559] sm:$0xff]
    %561 = vmatprep.subr.mxu0 0.0
    %562 = vmatpush1.msra.mxu0 %v53
    %563 = vmatprep.subr.mxu0 0.0
    %564 = vmatpush1.msra.mxu0 %v54
    %565 = vmatprep.subr.mxu0 0.0
    %566 = vmatpush1.msra.mxu0 %v55
    %567 = vmatprep.subr.mxu0 0.0
    %568 = vmatpush1.msra.mxu0 %v56
    %569 = vmatprep.subr.mxu0 0.0
    %570 = vmatpush1.msra.mxu0 %v57
    %571 = vmatprep.subr.mxu0 0.0
    %572 = vmatpush1.msra.mxu0 %v58
    %573 = vmatprep.subr.mxu0 0.0
    %574 = vmatpush1.msra.mxu0 %v59
    %575 = vmatprep.subr.mxu0 0.0
    %576 = vmatpush1.msra.mxu0 %v60
    %577 = vmatprep.subr.mxu0 0.0
    %578 = vmatpush1.msra.mxu0 %v61
    %579 = vmatprep.subr.mxu0 0.0
    %580 = vmatpush1.msra.mxu0 %v62
    %581 = vmatprep.subr.mxu0 0.0
    %582 = vmatpush1.msra.mxu0 %v63
    %583 = vmatprep.subr.mxu0 0.0
    %584 = vmatpush1.msra.mxu0 %v64
    %585 = vmatprep.subr.mxu0 0.0
    %586 = vmatpush1.msra.mxu0 %v65
    %587 = vmatprep.subr.mxu0 0.0
    %588 = vmatpush1.msra.mxu0 %v66
    %589 = vmatprep.subr.mxu0 0.0
    %590 = vmatpush1.msra.mxu0 %v67
    %591 = vmatprep.subr.mxu0 0.0
    %592 = vmatpush1.msra.mxu0 %v68
    %593 = vmatprep.subr.mxu0 0.0
    %594 = vmatpush1.msra.mxu0 0.0
    %595 = vmatprep.subr.mxu0 0.0
    %596 = vmatpush1.msra.mxu0 0.0
    %597 = vmatprep.subr.mxu0 0.0
    %598 = vmatpush1.msra.mxu0 0.0
    %599 = vmatprep.subr.mxu0 0.0
    %600 = vmatpush1.msra.mxu0 0.0
    %601 = vmatprep.subr.mxu0 0.0
    %602 = vmatpush1.msra.mxu0 0.0
    %603 = vmatprep.subr.mxu0 0.0
    %604 = vmatpush1.msra.mxu0 0.0
    %605 = vmatprep.subr.mxu0 0.0
    %606 = vmatpush1.msra.mxu0 0.0
    %607 = vmatprep.subr.mxu0 0.0
    %608 = vmatpush1.msra.mxu0 0.0
    %609 = vmatprep.subr.mxu0 0.0
    %610 = vmatpush1.msra.mxu0 0.0
    %611 = vmatprep.subr.mxu0 0.0
    %612 = vmatpush1.msra.mxu0 0.0
    %613 = vmatprep.subr.mxu0 0.0
    %614 = vmatpush1.msra.mxu0 0.0
    %615 = vmatprep.subr.mxu0 0.0
    %616 = vmatpush1.msra.mxu0 0.0
    %617 = vmatprep.subr.mxu0 0.0
    %618 = vmatpush1.msra.mxu0 0.0
    %619 = vmatprep.subr.mxu0 0.0
    %620 = vmatpush1.msra.mxu0 0.0
    %621 = vmatprep.subr.mxu0 0.0
    %622 = vmatpush1.msra.mxu0 0.0
    %623 = vmatprep.subr.mxu0 0.0
    %624 = vmatpush1.msra.mxu0 0.0
    %625 = vmatprep.mubr.f32.mxu0 0.0
    %626 = vmatmul.mubr.f32.gmra.mrb[0].mxu0 %v548
    %v627 = vpop.f32.mrb[0].mxu0
    %v628 = vadd.f32 0.0, %v627
    %v629 = vpop.f32.mrb[0].mxu0
    %630 = vdwg.mxu0
    %v631 = vadd.f32 %v560, %v628
    %v632 = vtanh.pop %v631
    %v633 = vmul.f32 %v632, 0.05
    %v634 = vadd.f32 %v546, %v633
    %v635 = vmul.f32 %v74, %v548
    %v636 = vsub.f32 %v634, %v635
    %v637 = vmul.f32 %v81, %v546
    %v638 = vsub.f32 %v636, %v637
    %v639 = vmul.f32 %v558, 0.8
    %v640 = vsub.f32 %v638, %v639
    %v641 = vmul.f32 %v640, 0.05
    %v642 = vadd.f32 %v548, %v641
    %s643 = scalar_lea.vmem [#allocation10], 160
    %644 = vst [vmem:[%s643] sm:$0xff] %v642
    %645 = vst [vmem:[%s643 + $0x8] sm:$0xff] %v640
    %646 = vst [vmem:[%s643 + $0x10] sm:$0xff] %v558
    %647 = vst [vmem:[%s643 + $0x18] sm:$0xff] %v556
    %vm648 = vcmp.gt.f32.partialorder %v558, 1.0
    %v649 = vsel %vm648, 1, 0
    %v650 = vcvt.s32.f32 %v649
    %v651 = vsel %vm648, 0.0, %v558
    %v652 = vmul.f32 %v651, 0.975
    %s653 = scalar_lea.vmem [#allocation5], 48
    %v654 = vld [vmem:[%s653] sm:$0xff]
    %655 = vmatprep.subr.mxu0 0.0
    %656 = vmatpush1.msra.mxu0 %v53
    %657 = vmatprep.subr.mxu0 0.0
    %658 = vmatpush1.msra.mxu0 %v54
    %659 = vmatprep.subr.mxu0 0.0
    %660 = vmatpush1.msra.mxu0 %v55
    %661 = vmatprep.subr.mxu0 0.0
    %662 = vmatpush1.msra.mxu0 %v56
    %663 = vmatprep.subr.mxu0 0.0
    %664 = vmatpush1.msra.mxu0 %v57
    %665 = vmatprep.subr.mxu0 0.0
    %666 = vmatpush1.msra.mxu0 %v58
    %667 = vmatprep.subr.mxu0 0.0
    %668 = vmatpush1.msra.mxu0 %v59
    %669 = vmatprep.subr.mxu0 0.0
    %670 = vmatpush1.msra.mxu0 %v60
    %671 = vmatprep.subr.mxu0 0.0
    %672 = vmatpush1.msra.mxu0 %v61
    %673 = vmatprep.subr.mxu0 0.0
    %674 = vmatpush1.msra.mxu0 %v62
    %675 = vmatprep.subr.mxu0 0.0
    %676 = vmatpush1.msra.mxu0 %v63
    %677 = vmatprep.subr.mxu0 0.0
    %678 = vmatpush1.msra.mxu0 %v64
    %679 = vmatprep.subr.mxu0 0.0
    %680 = vmatpush1.msra.mxu0 %v65
    %681 = vmatprep.subr.mxu0 0.0
    %682 = vmatpush1.msra.mxu0 %v66
    %683 = vmatprep.subr.mxu0 0.0
    %684 = vmatpush1.msra.mxu0 %v67
    %685 = vmatprep.subr.mxu0 0.0
    %686 = vmatpush1.msra.mxu0 %v68
    %687 = vmatprep.subr.mxu0 0.0
    %688 = vmatpush1.msra.mxu0 0.0
    %689 = vmatprep.subr.mxu0 0.0
    %690 = vmatpush1.msra.mxu0 0.0
    %691 = vmatprep.subr.mxu0 0.0
    %692 = vmatpush1.msra.mxu0 0.0
    %693 = vmatprep.subr.mxu0 0.0
    %694 = vmatpush1.msra.mxu0 0.0
    %695 = vmatprep.subr.mxu0 0.0
    %696 = vmatpush1.msra.mxu0 0.0
    %697 = vmatprep.subr.mxu0 0.0
    %698 = vmatpush1.msra.mxu0 0.0
    %699 = vmatprep.subr.mxu0 0.0
    %700 = vmatpush1.msra.mxu0 0.0
    %701 = vmatprep.subr.mxu0 0.0
    %702 = vmatpush1.msra.mxu0 0.0
    %703 = vmatprep.subr.mxu0 0.0
    %704 = vmatpush1.msra.mxu0 0.0
    %705 = vmatprep.subr.mxu0 0.0
    %706 = vmatpush1.msra.mxu0 0.0
    %707 = vmatprep.subr.mxu0 0.0
    %708 = vmatpush1.msra.mxu0 0.0
    %709 = vmatprep.subr.mxu0 0.0
    %710 = vmatpush1.msra.mxu0 0.0
    %711 = vmatprep.subr.mxu0 0.0
    %712 = vmatpush1.msra.mxu0 0.0
    %713 = vmatprep.subr.mxu0 0.0
    %714 = vmatpush1.msra.mxu0 0.0
    %715 = vmatprep.subr.mxu0 0.0
    %716 = vmatpush1.msra.mxu0 0.0
    %717 = vmatprep.subr.mxu0 0.0
    %718 = vmatpush1.msra.mxu0 0.0
    %719 = vmatprep.mubr.f32.mxu0 0.0
    %720 = vmatmul.mubr.f32.gmra.mrb[0].mxu0 %v642
    %v721 = vpop.f32.mrb[0].mxu0
    %v722 = vadd.f32 0.0, %v721
    %v723 = vpop.f32.mrb[0].mxu0
    %724 = vdwg.mxu0
    %v725 = vadd.f32 %v654, %v722
    %v726 = vtanh.pop %v725
    %v727 = vmul.f32 %v726, 0.05
    %v728 = vadd.f32 %v640, %v727
    %v729 = vmul.f32 %v74, %v642
    %v730 = vsub.f32 %v728, %v729
    %v731 = vmul.f32 %v81, %v640
    %v732 = vsub.f32 %v730, %v731
    %v733 = vmul.f32 %v652, 0.8
    %v734 = vsub.f32 %v732, %v733
    %v735 = vmul.f32 %v734, 0.05
    %v736 = vadd.f32 %v642, %v735
    %s737 = scalar_lea.vmem [#allocation10], 192
    %738 = vst [vmem:[%s737] sm:$0xff] %v736
    %739 = vst [vmem:[%s737 + $0x8] sm:$0xff] %v734
    %740 = vst [vmem:[%s737 + $0x10] sm:$0xff] %v652
    %741 = vst [vmem:[%s737 + $0x18] sm:$0xff] %v650
    %vm742 = vcmp.gt.f32.partialorder %v652, 1.0
    %v743 = vsel %vm742, 1, 0
    %v744 = vcvt.s32.f32 %v743
    %v745 = vsel %vm742, 0.0, %v652
    %v746 = vmul.f32 %v745, 0.975
    %s747 = scalar_lea.vmem [#allocation5], 56
    %v748 = vld [vmem:[%s747] sm:$0xff]
    %749 = vmatprep.subr.mxu0 0.0
    %750 = vmatpush1.msra.mxu0 %v53
    %751 = vmatprep.subr.mxu0 0.0
    %752 = vmatpush1.msra.mxu0 %v54
    %753 = vmatprep.subr.mxu0 0.0
    %754 = vmatpush1.msra.mxu0 %v55
    %755 = vmatprep.subr.mxu0 0.0
    %756 = vmatpush1.msra.mxu0 %v56
    %757 = vmatprep.subr.mxu0 0.0
    %758 = vmatpush1.msra.mxu0 %v57
    %759 = vmatprep.subr.mxu0 0.0
    %760 = vmatpush1.msra.mxu0 %v58
    %761 = vmatprep.subr.mxu0 0.0
    %762 = vmatpush1.msra.mxu0 %v59
    %763 = vmatprep.subr.mxu0 0.0
    %764 = vmatpush1.msra.mxu0 %v60
    %765 = vmatprep.subr.mxu0 0.0
    %766 = vmatpush1.msra.mxu0 %v61
    %767 = vmatprep.subr.mxu0 0.0
    %768 = vmatpush1.msra.mxu0 %v62
    %769 = vmatprep.subr.mxu0 0.0
    %770 = vmatpush1.msra.mxu0 %v63
    %771 = vmatprep.subr.mxu0 0.0
    %772 = vmatpush1.msra.mxu0 %v64
    %773 = vmatprep.subr.mxu0 0.0
    %774 = vmatpush1.msra.mxu0 %v65
    %775 = vmatprep.subr.mxu0 0.0
    %776 = vmatpush1.msra.mxu0 %v66
    %777 = vmatprep.subr.mxu0 0.0
    %778 = vmatpush1.msra.mxu0 %v67
    %779 = vmatprep.subr.mxu0 0.0
    %780 = vmatpush1.msra.mxu0 %v68
    %781 = vmatprep.subr.mxu0 0.0
    %782 = vmatpush1.msra.mxu0 0.0
    %783 = vmatprep.subr.mxu0 0.0
    %784 = vmatpush1.msra.mxu0 0.0
    %785 = vmatprep.subr.mxu0 0.0
    %786 = vmatpush1.msra.mxu0 0.0
    %787 = vmatprep.subr.mxu0 0.0
    %788 = vmatpush1.msra.mxu0 0.0
    %789 = vmatprep.subr.mxu0 0.0
    %790 = vmatpush1.msra.mxu0 0.0
    %791 = vmatprep.subr.mxu0 0.0
    %792 = vmatpush1.msra.mxu0 0.0
    %793 = vmatprep.subr.mxu0 0.0
    %794 = vmatpush1.msra.mxu0 0.0
    %795 = vmatprep.subr.mxu0 0.0
    %796 = vmatpush1.msra.mxu0 0.0
    %797 = vmatprep.subr.mxu0 0.0
    %798 = vmatpush1.msra.mxu0 0.0
    %799 = vmatprep.subr.mxu0 0.0
    %800 = vmatpush1.msra.mxu0 0.0
    %801 = vmatprep.subr.mxu0 0.0
    %802 = vmatpush1.msra.mxu0 0.0
    %803 = vmatprep.subr.mxu0 0.0
    %804 = vmatpush1.msra.mxu0 0.0
    %805 = vmatprep.subr.mxu0 0.0
    %806 = vmatpush1.msra.mxu0 0.0
    %807 = vmatprep.subr.mxu0 0.0
    %808 = vmatpush1.msra.mxu0 0.0
    %809 = vmatprep.subr.mxu0 0.0
    %810 = vmatpush1.msra.mxu0 0.0
    %811 = vmatprep.subr.mxu0 0.0
    %812 = vmatpush1.msra.mxu0 0.0
    %813 = vmatprep.mubr.f32.mxu0 0.0
    %814 = vmatmul.mubr.f32.gmra.mrb[0].mxu0 %v736
    %v815 = vpop.f32.mrb[0].mxu0
    %v816 = vadd.f32 0.0, %v815
    %v817 = vpop.f32.mrb[0].mxu0
    %818 = vdwg.mxu0
    %v819 = vadd.f32 %v748, %v816
    %v820 = vtanh.pop %v819
    %v821 = vmul.f32 %v820, 0.05
    %v822 = vadd.f32 %v734, %v821
    %v823 = vmul.f32 %v74, %v736
    %v824 = vsub.f32 %v822, %v823
    %v825 = vmul.f32 %v81, %v734
    %v826 = vsub.f32 %v824, %v825
    %v827 = vmul.f32 %v746, 0.8
    %v828 = vsub.f32 %v826, %v827
    %v829 = vmul.f32 %v828, 0.05
    %v830 = vadd.f32 %v736, %v829
    %s831 = scalar_lea.vmem [#allocation10], 224
    %832 = vst [vmem:[%s831] sm:$0xff] %v830
    %833 = vst [vmem:[%s831 + $0x8] sm:$0xff] %v828
    %834 = vst [vmem:[%s831 + $0x10] sm:$0xff] %v746
    %835 = vst [vmem:[%s831 + $0x18] sm:$0xff] %v744
    %836 = vst [vmem:[#allocation2] sm:$0xff] %v830
    %837 = vst [vmem:[#allocation3] sm:$0xff] %v828
    %838 = vst [vmem:[#allocation4] sm:$0xff] %v746
    // Predicated region
    $region30: #{tpu_custom_call.1} parent=1 // pred_check
      _
    $region31: #{tpu_custom_call.1} parent=1 // pred_check_branch
      %840 = sbr.rel (0) target = $region33
    $region32: #{tpu_custom_call.1} parent=1 // pred_region
      %s842 = ssub.s32 4096, 4096
      %843 = vsyncadd [#allocation7], %s842
      %s844 = sshll.u32 [#allocation10], 4
      %s845 = int_to_ptr.vmem [resolvable:$true] %s844
      %850 = dma.vmem_to_hbm [thread:$0]  %s845, 4096, %s4, [#allocation7], 512, 512, 32
    $region33: #{tpu_custom_call.1} parent=1 // pred_fallthru
      _
    // Predicated region
    $region34: #{tpu_custom_call.1} parent=1 // pred_check
      _
    $region35: #{tpu_custom_call.1} parent=1 // pred_check_branch
      %852 = sbr.rel (0) target = $region37
    $region36: #{tpu_custom_call.1} parent=1 // pred_region
      %853 = dma.done [#allocation7], 4096
    $region37: #{tpu_custom_call.1} parent=1 // pred_fallthru
      _
    %854 = vsyncpa [#allocation6], 1
    %855 = vsyncpa [#allocation9], 1
    %856 = vsyncpa [#allocation7], 1

</llo_original>
